<compile_context>
chip_gen: v5e
topology: v5e:2x2
jax: 0.10.0
libtpu: 0.0.40
codegen_flags: <defaults>
</compile_context>

<pallas_src>
import functools

import jax
import jax.numpy as jnp
from jax import lax
from jax.experimental import pallas as pl
from jax.experimental.pallas import tpu as pltpu

N_ADJ = 4           # CircConv n_adj -> kernel size 2*n_adj+1 = 9
DILATION = 1        # conv_type == 'grid' (CircConv); dilation fixed to 1
EPS = 1e-5          # nn.BatchNorm1d default eps
MAX_BATCH_TILE = 8  # batches processed per grid step (static unroll)


def _batch_tile(b, max_tb=MAX_BATCH_TILE):
    """Largest divisor of b that is <= max_tb (so no ragged batch tail ever exists)."""
    for tb in range(min(b, max_tb), 0, -1):
        if b % tb == 0:
            return tb
    return 1


def fused_block_kernel(x_ref, w_ref, b_ref, g_ref, bt_ref, o_ref,
                       y_sc, sum_sc, m2_sc, scale_sc, shift_sc,
                       *, tb, inv_count, eps, matmul_dtype):
    """3-phase fused BasicBlock (conv+ReLU -> exact variance -> normalize+store)."""
    p = pl.program_id(0)   # phase
    i = pl.program_id(1)   # batch tile
    K, O, C = w_ref.shape
    L = x_ref.shape[-1]
    pad = (K - 1) // 2

    # ---- phase 0: circular conv + bias + ReLU into VMEM scratch, per-channel sums ----------
    @pl.when(p == 0)
    def _conv_phase():
        @pl.when(i == 0)
        def _():
            sum_sc[...] = jnp.zeros((O, 1), jnp.float32)

        w = w_ref[...]                       # [K, O, C] (matmul dtype)
        bias = b_ref[...]                    # [O, 1] f32
        part = jnp.zeros((O, 1), jnp.float32)
        for b in range(tb):                  # static unroll over the batch tile
            xb = x_ref[b]                    # [C, L] f32
            # Circular halo assembled in VMEM (no HBM im2col / padding).
            xe = jnp.concatenate([xb[:, L - pad:], xb, xb[:, :pad]],
                                 axis=1).astype(matmul_dtype)       # [C, L + 2*pad]
            acc = jnp.zeros((O, L), jnp.float32)
            for k in range(K):               # 9 accumulating MXU dots (f32 accumulation)
                acc = acc + jnp.dot(w[k], xe[:, k:k + L],
                                    preferred_element_type=jnp.float32)
            # TODO(synk): for tiny C/O (like this demo) a 9-tap VPU-FMA path would beat the
            # nearly-empty MXU dots; kept as matmuls since they scale to realistic state dims.
            y = jnp.maximum(acc + bias, 0.0)                        # [O, L] f32
            y_sc[i * tb + b] = y
            part = part + jnp.sum(y, axis=1, keepdims=True)
        sum_sc[...] += part

    # ---- phase 1: exact centered variance (second pass over the VMEM scratch) --------------
    @pl.when(p == 1)
    def _var_phase():
        @pl.when(i == 0)
        def _():
            sum_sc[...] = sum_sc[...] * inv_count                   # sum -> mean (in place)
            m2_sc[...] = jnp.zeros((O, 1), jnp.float32)

        mean = sum_sc[...]                                          # [O, 1]
        yt = y_sc[pl.ds(i * tb, tb)]                                # [TB, O, L]
        c = yt - mean[None]
        per_b = jnp.sum(c * c, axis=2, keepdims=True)               # [TB, O, 1]
        m2_sc[...] += jnp.sum(per_b, axis=0)                        # [O, 1]

    # ---- phase 2: fold BN affine, normalize, write final NCW layout -------------------------
    @pl.when(p == 2)
    def _norm_phase():
        @pl.when(i == 0)
        def _():
            var = m2_sc[...] * inv_count
            inv = lax.rsqrt(var + eps)
            scale = g_ref[...] * inv
            scale_sc[...] = scale
            shift_sc[...] = bt_ref[...] - sum_sc[...] * scale       # sum_sc holds the mean

        yt = y_sc[pl.ds(i * tb, tb)]                                # [TB, O, L]
        o_ref[...] = (yt * scale_sc[...][None]
                      + shift_sc[...][None]).astype(o_ref.dtype)


@functools.partial(jax.jit, static_argnames=("matmul_dtype",))
def basic_block_forward(x, weight, bias, gamma, beta, *, matmul_dtype=jnp.bfloat16):
    """x: [B, C, L] (PyTorch NCW). weight: [O, C, K]. Returns [B, O, L] (f32)."""
    B, C, L = x.shape
    O, _, K = weight.shape

    TB = _batch_tile(B)
    num_tiles = B // TB
    last = num_tiles - 1

    # The activation lives entirely in VMEM (single fused launch). Demo sizes are ~1 KB;
    # keep headroom under the 32 MiB scoped budget (safe on v5e/v6e/v7x).
    assert B * O * L * 4 <= 24 * 1024 * 1024, (
        "activation too large for the fused VMEM-resident kernel")
    # TODO(synk): add a tiled two-pass fallback (y staged through HBM, parallel batch axis)
    # for activations that do not fit in VMEM.

    w_koc = jnp.transpose(weight, (2, 0, 1)).astype(matmul_dtype)   # [K, O, C] (tiny copy)
    bias_col = bias.reshape(O, 1).astype(jnp.float32)
    gamma_col = gamma.reshape(O, 1).astype(jnp.float32)
    beta_col = beta.reshape(O, 1).astype(jnp.float32)

    kernel = functools.partial(
        fused_block_kernel, tb=TB, inv_count=1.0 / float(B * L), eps=EPS,
        matmul_dtype=matmul_dtype)

    grid_spec = pltpu.PrefetchScalarGridSpec(
        num_scalar_prefetch=0,
        grid=(3, num_tiles),
        in_specs=[
            # x is only consumed in phase 0; freeze the block index afterwards so the
            # pipeline never re-fetches it.
            pl.BlockSpec((TB, C, L), lambda p, i: (jnp.where(p == 0, i, last), 0, 0)),
            pl.BlockSpec((K, O, C), lambda p, i: (0, 0, 0)),
            pl.BlockSpec((O, 1), lambda p, i: (0, 0)),
            pl.BlockSpec((O, 1), lambda p, i: (0, 0)),
            pl.BlockSpec((O, 1), lambda p, i: (0, 0)),
        ],
        # Output blocks are only produced in phase 2; earlier phases keep the block index at 0
        # so no (garbage) writeback happens before the block is actually filled.
        out_specs=pl.BlockSpec((TB, O, L), lambda p, i: (jnp.where(p == 2, i, 0), 0, 0)),
        scratch_shapes=[
            pltpu.VMEM((B, O, L), jnp.float32),   # VMEM-resident activation y
            pltpu.VMEM((O, 1), jnp.float32),      # per-channel sum -> mean
            pltpu.VMEM((O, 1), jnp.float32),      # centered sum of squares
            pltpu.VMEM((O, 1), jnp.float32),      # folded BN scale
            pltpu.VMEM((O, 1), jnp.float32),      # folded BN shift
        ],
    )

    out = pl.pallas_call(
        kernel,
        grid_spec=grid_spec,
        out_shape=jax.ShapeDtypeStruct((B, O, L), jnp.float32),
        compiler_params=pltpu.CompilerParams(
            dimension_semantics=("arbitrary", "arbitrary"),
            vmem_limit_bytes=32 * 1024 * 1024,
        ),
    )(x, w_koc, bias_col, gamma_col, beta_col)
    # TODO(synk): running_mean / running_var updates of nn.BatchNorm1d are stateful and not
    # reproduced here (forward output only).
    return out


def reference(x, weight, bias, gamma, beta):
    """Plain-JAX reference mirroring the PyTorch forward."""
    pad = N_ADJ * DILATION
    x_pad = jnp.concatenate([x[..., -pad:], x, x[..., :pad]], axis=-1)
    y = lax.conv_general_dilated(
        x_pad, weight, window_strides=(1,), padding="VALID",
        rhs_dilation=(DILATION,), dimension_numbers=("NCH", "OIH", "NCH"))
    y = y + bias.reshape(1, -1, 1)
    y = jnp.maximum(y, 0.0)
    mean = jnp.mean(y, axis=(0, 2), keepdims=True)
    var = jnp.mean((y - mean) ** 2, axis=(0, 2), keepdims=True)
    y = (y - mean) / jnp.sqrt(var + EPS)
    return y * gamma.reshape(1, -1, 1) + beta.reshape(1, -1, 1)


if __name__ == "__main__":
    B, C, O, L = 2, 4, 8, 16          # batch, state_dim, out_state_dim, num points
    K = 2 * N_ADJ + 1                  # = 9

    key = jax.random.PRNGKey(0)
    k1, k2, k3, k4, k5 = jax.random.split(key, 5)
    x = jax.random.normal(k1, (B, C, L), dtype=jnp.float32)

    # Deterministic synthetic parameters (Conv1d-style uniform fan-in init; non-trivial affine)
    bound = 1.0 / (C * K) ** 0.5
    weight = jax.random.uniform(k2, (O, C, K), jnp.float32, -bound, bound)
    bias = jax.random.uniform(k3, (O,), jnp.float32, -bound, bound)
    gamma = 1.0 + 0.1 * jax.random.normal(k4, (O,), dtype=jnp.float32)
    beta = 0.1 * jax.random.normal(k5, (O,), dtype=jnp.float32)

    ref = jax.block_until_ready(reference(x, weight, bias, gamma, beta))

    # f32 matmul path: tight check against the f32 reference.
    out_f32 = jax.block_until_ready(
        basic_block_forward(x, weight, bias, gamma, beta, matmul_dtype=jnp.float32))
    assert out_f32.shape == (B, O, L), out_f32.shape
    assert jnp.allclose(out_f32, ref, atol=1e-4, rtol=1e-4), \
        float(jnp.max(jnp.abs(out_f32 - ref)))

    # Default bf16 matmul inputs (f32 accumulation / f32 BN stats): looser check.
    out_bf16 = jax.block_until_ready(
        basic_block_forward(x, weight, bias, gamma, beta))
    assert jnp.allclose(out_bf16, ref, atol=1e-1, rtol=1e-1), \
        float(jnp.max(jnp.abs(out_bf16 - ref)))

    print("KERNEL_OK")
</pallas_src>

<mosaic_0001>
module attributes {stable_mosaic.version = 11 : i64} {
  func.func @fused_block_kernel(%arg0: i32, %arg1: i32, %arg2: memref<2x4x16xf32, #tpu.memory_space<vmem>>, %arg3: memref<9x8x4xf32, #tpu.memory_space<vmem>>, %arg4: memref<8x1xf32, #tpu.memory_space<vmem>>, %arg5: memref<8x1xf32, #tpu.memory_space<vmem>>, %arg6: memref<8x1xf32, #tpu.memory_space<vmem>>, %arg7: memref<2x8x16xf32, #tpu.memory_space<vmem>>, %arg8: memref<2x8x16xf32, #tpu.memory_space<vmem>>, %arg9: memref<8x1xf32, #tpu.memory_space<vmem>>, %arg10: memref<8x1xf32, #tpu.memory_space<vmem>>, %arg11: memref<8x1xf32, #tpu.memory_space<vmem>>, %arg12: memref<8x1xf32, #tpu.memory_space<vmem>>) attributes {dimension_semantics = [#tpu.dimension_semantics<arbitrary>, #tpu.dimension_semantics<arbitrary>], iteration_bounds = array<i64: 3, 1>, scalar_prefetch = 0 : i64, scratch_operands = 5 : i64, tpu.core_type = #tpu.core_type<tc>, window_params = [{transform_indices = @transform_0, window_bounds = array<i64: 2, 4, 16>}, {pipeline_mode = #tpu.pipeline_mode<synchronous>, transform_indices = @transform_1, window_bounds = array<i64: 9, 8, 4>}, {pipeline_mode = #tpu.pipeline_mode<synchronous>, transform_indices = @transform_2, window_bounds = array<i64: 8, 1>}, {pipeline_mode = #tpu.pipeline_mode<synchronous>, transform_indices = @transform_3, window_bounds = array<i64: 8, 1>}, {pipeline_mode = #tpu.pipeline_mode<synchronous>, transform_indices = @transform_4, window_bounds = array<i64: 8, 1>}, {transform_indices = @transform_5, window_bounds = array<i64: 2, 8, 16>}]} {
    %c0_i32 = arith.constant 0 : i32
    %0 = arith.cmpi eq, %arg0, %c0_i32 : i32
    %1 = arith.extui %0 : i1 to i32
    %c0_i32_0 = arith.constant 0 : i32
    %2 = arith.cmpi ne, %1, %c0_i32_0 : i32
    scf.if %2 {
      %c0_i32_3 = arith.constant 0 : i32
      %9 = arith.cmpi eq, %arg1, %c0_i32_3 : i32
      %10 = arith.extui %9 : i1 to i32
      %c0_i32_4 = arith.constant 0 : i32
      %11 = arith.cmpi ne, %10, %c0_i32_4 : i32
      scf.if %11 {
        %cst_50 = arith.constant 0.000000e+00 : f32
        %146 = vector.broadcast %cst_50 : f32 to vector<8x1xf32>
        %c0_51 = arith.constant 0 : index
        %c0_52 = arith.constant 0 : index
        %147 = vector.load %arg9[%c0_51, %c0_52] : memref<8x1xf32, #tpu.memory_space<vmem>>, vector<8x1xf32>
        tpu.vector_store %arg9[%c0_51, %c0_52], %146 {strides = array<i32>} : memref<8x1xf32, #tpu.memory_space<vmem>>, vector<8x1xf32>,
      } else {
      }
      %c0 = arith.constant 0 : index
      %c0_5 = arith.constant 0 : index
      %c0_6 = arith.constant 0 : index
      %12 = vector.load %arg3[%c0, %c0_5, %c0_6] : memref<9x8x4xf32, #tpu.memory_space<vmem>>, vector<9x8x4xf32>
      %c0_7 = arith.constant 0 : index
      %c0_8 = arith.constant 0 : index
      %13 = vector.load %arg4[%c0_7, %c0_8] : memref<8x1xf32, #tpu.memory_space<vmem>>, vector<8x1xf32>
      %cst = arith.constant 0.000000e+00 : f32
      %14 = vector.broadcast %cst : f32 to vector<8x1xf32>
      %c0_9 = arith.constant 0 : index
      %c0_10 = arith.constant 0 : index
      %c0_11 = arith.constant 0 : index
      %15 = vector.load %arg2[%c0_9, %c0_10, %c0_11] : memref<2x4x16xf32, #tpu.memory_space<vmem>>, vector<1x4x16xf32>
      %16 = vector.shape_cast %15 : vector<1x4x16xf32> to vector<4x16xf32>
      %17 = vector.extract_strided_slice %16 {offsets = [0, 12], sizes = [4, 4], strides = [1, 1]} : vector<4x16xf32> to vector<4x4xf32>
      %18 = vector.extract_strided_slice %16 {offsets = [0, 0], sizes = [4, 4], strides = [1, 1]} : vector<4x16xf32> to vector<4x4xf32>
      %19 = tpu.concatenate %17, %16, %18 in 1 : vector<4x4xf32>, vector<4x16xf32>, vector<4x4xf32> -> vector<4x24xf32>
      %cst_12 = arith.constant 0.000000e+00 : f32
      %20 = vector.broadcast %cst_12 : f32 to vector<8x16xf32>
      %21 = vector.extract_strided_slice %12 {offsets = [0, 0, 0], sizes = [1, 8, 4], strides = [1, 1, 1]} : vector<9x8x4xf32> to vector<1x8x4xf32>
      %22 = vector.shape_cast %21 : vector<1x8x4xf32> to vector<8x4xf32>
      %23 = vector.extract_strided_slice %19 {offsets = [0, 0], sizes = [4, 16], strides = [1, 1]} : vector<4x24xf32> to vector<4x16xf32>
      %cst_13 = arith.constant dense<0.000000e+00> : vector<8x16xf32>
      %24 = tpu.matmul %22, %23, %cst_13 {dimension_numbers = #tpu.dot_dimension_numbers<[1], [0], [0], [1], [0, 0, 1, 1], [], []>} : vector<8x4xf32>, vector<4x16xf32>, vector<8x16xf32> -> vector<8x16xf32>
      %25 = arith.addf %20, %24 : vector<8x16xf32>
      %26 = vector.extract_strided_slice %12 {offsets = [1, 0, 0], sizes = [1, 8, 4], strides = [1, 1, 1]} : vector<9x8x4xf32> to vector<1x8x4xf32>
      %27 = vector.shape_cast %26 : vector<1x8x4xf32> to vector<8x4xf32>
      %28 = vector.extract_strided_slice %19 {offsets = [0, 1], sizes = [4, 16], strides = [1, 1]} : vector<4x24xf32> to vector<4x16xf32>
      %cst_14 = arith.constant dense<0.000000e+00> : vector<8x16xf32>
      %29 = tpu.matmul %27, %28, %cst_14 {dimension_numbers = #tpu.dot_dimension_numbers<[1], [0], [0], [1], [0, 0, 1, 1], [], []>} : vector<8x4xf32>, vector<4x16xf32>, vector<8x16xf32> -> vector<8x16xf32>
      %30 = arith.addf %25, %29 : vector<8x16xf32>
      %31 = vector.extract_strided_slice %12 {offsets = [2, 0, 0], sizes = [1, 8, 4], strides = [1, 1, 1]} : vector<9x8x4xf32> to vector<1x8x4xf32>
      %32 = vector.shape_cast %31 : vector<1x8x4xf32> to vector<8x4xf32>
      %33 = vector.extract_strided_slice %19 {offsets = [0, 2], sizes = [4, 16], strides = [1, 1]} : vector<4x24xf32> to vector<4x16xf32>
      %cst_15 = arith.constant dense<0.000000e+00> : vector<8x16xf32>
      %34 = tpu.matmul %32, %33, %cst_15 {dimension_numbers = #tpu.dot_dimension_numbers<[1], [0], [0], [1], [0, 0, 1, 1], [], []>} : vector<8x4xf32>, vector<4x16xf32>, vector<8x16xf32> -> vector<8x16xf32>
      %35 = arith.addf %30, %34 : vector<8x16xf32>
      %36 = vector.extract_strided_slice %12 {offsets = [3, 0, 0], sizes = [1, 8, 4], strides = [1, 1, 1]} : vector<9x8x4xf32> to vector<1x8x4xf32>
      %37 = vector.shape_cast %36 : vector<1x8x4xf32> to vector<8x4xf32>
      %38 = vector.extract_strided_slice %19 {offsets = [0, 3], sizes = [4, 16], strides = [1, 1]} : vector<4x24xf32> to vector<4x16xf32>
      %cst_16 = arith.constant dense<0.000000e+00> : vector<8x16xf32>
      %39 = tpu.matmul %37, %38, %cst_16 {dimension_numbers = #tpu.dot_dimension_numbers<[1], [0], [0], [1], [0, 0, 1, 1], [], []>} : vector<8x4xf32>, vector<4x16xf32>, vector<8x16xf32> -> vector<8x16xf32>
      %40 = arith.addf %35, %39 : vector<8x16xf32>
      %41 = vector.extract_strided_slice %12 {offsets = [4, 0, 0], sizes = [1, 8, 4], strides = [1, 1, 1]} : vector<9x8x4xf32> to vector<1x8x4xf32>
      %42 = vector.shape_cast %41 : vector<1x8x4xf32> to vector<8x4xf32>
      %43 = vector.extract_strided_slice %19 {offsets = [0, 4], sizes = [4, 16], strides = [1, 1]} : vector<4x24xf32> to vector<4x16xf32>
      %cst_17 = arith.constant dense<0.000000e+00> : vector<8x16xf32>
      %44 = tpu.matmul %42, %43, %cst_17 {dimension_numbers = #tpu.dot_dimension_numbers<[1], [0], [0], [1], [0, 0, 1, 1], [], []>} : vector<8x4xf32>, vector<4x16xf32>, vector<8x16xf32> -> vector<8x16xf32>
      %45 = arith.addf %40, %44 : vector<8x16xf32>
      %46 = vector.extract_strided_slice %12 {offsets = [5, 0, 0], sizes = [1, 8, 4], strides = [1, 1, 1]} : vector<9x8x4xf32> to vector<1x8x4xf32>
      %47 = vector.shape_cast %46 : vector<1x8x4xf32> to vector<8x4xf32>
      %48 = vector.extract_strided_slice %19 {offsets = [0, 5], sizes = [4, 16], strides = [1, 1]} : vector<4x24xf32> to vector<4x16xf32>
      %cst_18 = arith.constant dense<0.000000e+00> : vector<8x16xf32>
      %49 = tpu.matmul %47, %48, %cst_18 {dimension_numbers = #tpu.dot_dimension_numbers<[1], [0], [0], [1], [0, 0, 1, 1], [], []>} : vector<8x4xf32>, vector<4x16xf32>, vector<8x16xf32> -> vector<8x16xf32>
      %50 = arith.addf %45, %49 : vector<8x16xf32>
      %51 = vector.extract_strided_slice %12 {offsets = [6, 0, 0], sizes = [1, 8, 4], strides = [1, 1, 1]} : vector<9x8x4xf32> to vector<1x8x4xf32>
      %52 = vector.shape_cast %51 : vector<1x8x4xf32> to vector<8x4xf32>
      %53 = vector.extract_strided_slice %19 {offsets = [0, 6], sizes = [4, 16], strides = [1, 1]} : vector<4x24xf32> to vector<4x16xf32>
      %cst_19 = arith.constant dense<0.000000e+00> : vector<8x16xf32>
      %54 = tpu.matmul %52, %53, %cst_19 {dimension_numbers = #tpu.dot_dimension_numbers<[1], [0], [0], [1], [0, 0, 1, 1], [], []>} : vector<8x4xf32>, vector<4x16xf32>, vector<8x16xf32> -> vector<8x16xf32>
      %55 = arith.addf %50, %54 : vector<8x16xf32>
      %56 = vector.extract_strided_slice %12 {offsets = [7, 0, 0], sizes = [1, 8, 4], strides = [1, 1, 1]} : vector<9x8x4xf32> to vector<1x8x4xf32>
      %57 = vector.shape_cast %56 : vector<1x8x4xf32> to vector<8x4xf32>
      %58 = vector.extract_strided_slice %19 {offsets = [0, 7], sizes = [4, 16], strides = [1, 1]} : vector<4x24xf32> to vector<4x16xf32>
      %cst_20 = arith.constant dense<0.000000e+00> : vector<8x16xf32>
      %59 = tpu.matmul %57, %58, %cst_20 {dimension_numbers = #tpu.dot_dimension_numbers<[1], [0], [0], [1], [0, 0, 1, 1], [], []>} : vector<8x4xf32>, vector<4x16xf32>, vector<8x16xf32> -> vector<8x16xf32>
      %60 = arith.addf %55, %59 : vector<8x16xf32>
      %61 = vector.extract_strided_slice %12 {offsets = [8, 0, 0], sizes = [1, 8, 4], strides = [1, 1, 1]} : vector<9x8x4xf32> to vector<1x8x4xf32>
      %62 = vector.shape_cast %61 : vector<1x8x4xf32> to vector<8x4xf32>
      %63 = vector.extract_strided_slice %19 {offsets = [0, 8], sizes = [4, 16], strides = [1, 1]} : vector<4x24xf32> to vector<4x16xf32>
      %cst_21 = arith.constant dense<0.000000e+00> : vector<8x16xf32>
      %64 = tpu.matmul %62, %63, %cst_21 {dimension_numbers = #tpu.dot_dimension_numbers<[1], [0], [0], [1], [0, 0, 1, 1], [], []>} : vector<8x4xf32>, vector<4x16xf32>, vector<8x16xf32> -> vector<8x16xf32>
      %65 = arith.addf %60, %64 : vector<8x16xf32>
      %66 = vector.broadcast %13 : vector<8x1xf32> to vector<8x16xf32>
      %67 = arith.addf %65, %66 : vector<8x16xf32>
      %cst_22 = arith.constant 0.000000e+00 : f32
      %68 = vector.broadcast %cst_22 : f32 to vector<8x16xf32>
      %69 = arith.maximumf %67, %68 : vector<8x16xf32>
      %c2_i32_23 = arith.constant 2 : i32
      %70 = arith.muli %arg1, %c2_i32_23 : i32
      %c0_i32_24 = arith.constant 0 : i32
      %71 = arith.addi %70, %c0_i32_24 : i32
      %72 = arith.index_cast %71 : i32 to index
      %c0_25 = arith.constant 0 : index
      %c0_26 = arith.constant 0 : index
      %73 = vector.load %arg8[%72, %c0_25, %c0_26] : memref<2x8x16xf32, #tpu.memory_space<vmem>>, vector<1x8x16xf32>
      %74 = vector.shape_cast %73 : vector<1x8x16xf32> to vector<8x16xf32>
      %75 = vector.shape_cast %69 : vector<8x16xf32> to vector<1x8x16xf32>
      tpu.vector_store %arg8[%72, %c0_25, %c0_26], %75 {strides = array<i32>} : memref<2x8x16xf32, #tpu.memory_space<vmem>>, vector<1x8x16xf32>,
      %cst_27 = arith.constant dense<0.000000e+00> : vector<8xf32>
      %76 = vector.multi_reduction <add>, %69, %cst_27 [1] : vector<8x16xf32> to vector<8xf32>
      %77 = vector.shape_cast %76 : vector<8xf32> to vector<8x1xf32>
      %78 = arith.addf %14, %77 : vector<8x1xf32>
      %c1 = arith.constant 1 : index
      %c0_28 = arith.constant 0 : index
      %c0_29 = arith.constant 0 : index
      %79 = vector.load %arg2[%c1, %c0_28, %c0_29] : memref<2x4x16xf32, #tpu.memory_space<vmem>>, vector<1x4x16xf32>
      %80 = vector.shape_cast %79 : vector<1x4x16xf32> to vector<4x16xf32>
      %81 = vector.extract_strided_slice %80 {offsets = [0, 12], sizes = [4, 4], strides = [1, 1]} : vector<4x16xf32> to vector<4x4xf32>
      %82 = vector.extract_strided_slice %80 {offsets = [0, 0], sizes = [4, 4], strides = [1, 1]} : vector<4x16xf32> to vector<4x4xf32>
      %83 = tpu.concatenate %81, %80, %82 in 1 : vector<4x4xf32>, vector<4x16xf32>, vector<4x4xf32> -> vector<4x24xf32>
      %cst_30 = arith.constant 0.000000e+00 : f32
      %84 = vector.broadcast %cst_30 : f32 to vector<8x16xf32>
      %85 = vector.extract_strided_slice %12 {offsets = [0, 0, 0], sizes = [1, 8, 4], strides = [1, 1, 1]} : vector<9x8x4xf32> to vector<1x8x4xf32>
      %86 = vector.shape_cast %85 : vector<1x8x4xf32> to vector<8x4xf32>
      %87 = vector.extract_strided_slice %83 {offsets = [0, 0], sizes = [4, 16], strides = [1, 1]} : vector<4x24xf32> to vector<4x16xf32>
      %cst_31 = arith.constant dense<0.000000e+00> : vector<8x16xf32>
      %88 = tpu.matmul %86, %87, %cst_31 {dimension_numbers = #tpu.dot_dimension_numbers<[1], [0], [0], [1], [0, 0, 1, 1], [], []>} : vector<8x4xf32>, vector<4x16xf32>, vector<8x16xf32> -> vector<8x16xf32>
      %89 = arith.addf %84, %88 : vector<8x16xf32>
      %90 = vector.extract_strided_slice %12 {offsets = [1, 0, 0], sizes = [1, 8, 4], strides = [1, 1, 1]} : vector<9x8x4xf32> to vector<1x8x4xf32>
      %91 = vector.shape_cast %90 : vector<1x8x4xf32> to vector<8x4xf32>
      %92 = vector.extract_strided_slice %83 {offsets = [0, 1], sizes = [4, 16], strides = [1, 1]} : vector<4x24xf32> to vector<4x16xf32>
      %cst_32 = arith.constant dense<0.000000e+00> : vector<8x16xf32>
      %93 = tpu.matmul %91, %92, %cst_32 {dimension_numbers = #tpu.dot_dimension_numbers<[1], [0], [0], [1], [0, 0, 1, 1], [], []>} : vector<8x4xf32>, vector<4x16xf32>, vector<8x16xf32> -> vector<8x16xf32>
      %94 = arith.addf %89, %93 : vector<8x16xf32>
      %95 = vector.extract_strided_slice %12 {offsets = [2, 0, 0], sizes = [1, 8, 4], strides = [1, 1, 1]} : vector<9x8x4xf32> to vector<1x8x4xf32>
      %96 = vector.shape_cast %95 : vector<1x8x4xf32> to vector<8x4xf32>
      %97 = vector.extract_strided_slice %83 {offsets = [0, 2], sizes = [4, 16], strides = [1, 1]} : vector<4x24xf32> to vector<4x16xf32>
      %cst_33 = arith.constant dense<0.000000e+00> : vector<8x16xf32>
      %98 = tpu.matmul %96, %97, %cst_33 {dimension_numbers = #tpu.dot_dimension_numbers<[1], [0], [0], [1], [0, 0, 1, 1], [], []>} : vector<8x4xf32>, vector<4x16xf32>, vector<8x16xf32> -> vector<8x16xf32>
      %99 = arith.addf %94, %98 : vector<8x16xf32>
      %100 = vector.extract_strided_slice %12 {offsets = [3, 0, 0], sizes = [1, 8, 4], strides = [1, 1, 1]} : vector<9x8x4xf32> to vector<1x8x4xf32>
      %101 = vector.shape_cast %100 : vector<1x8x4xf32> to vector<8x4xf32>
      %102 = vector.extract_strided_slice %83 {offsets = [0, 3], sizes = [4, 16], strides = [1, 1]} : vector<4x24xf32> to vector<4x16xf32>
      %cst_34 = arith.constant dense<0.000000e+00> : vector<8x16xf32>
      %103 = tpu.matmul %101, %102, %cst_34 {dimension_numbers = #tpu.dot_dimension_numbers<[1], [0], [0], [1], [0, 0, 1, 1], [], []>} : vector<8x4xf32>, vector<4x16xf32>, vector<8x16xf32> -> vector<8x16xf32>
      %104 = arith.addf %99, %103 : vector<8x16xf32>
      %105 = vector.extract_strided_slice %12 {offsets = [4, 0, 0], sizes = [1, 8, 4], strides = [1, 1, 1]} : vector<9x8x4xf32> to vector<1x8x4xf32>
      %106 = vector.shape_cast %105 : vector<1x8x4xf32> to vector<8x4xf32>
      %107 = vector.extract_strided_slice %83 {offsets = [0, 4], sizes = [4, 16], strides = [1, 1]} : vector<4x24xf32> to vector<4x16xf32>
      %cst_35 = arith.constant dense<0.000000e+00> : vector<8x16xf32>
      %108 = tpu.matmul %106, %107, %cst_35 {dimension_numbers = #tpu.dot_dimension_numbers<[1], [0], [0], [1], [0, 0, 1, 1], [], []>} : vector<8x4xf32>, vector<4x16xf32>, vector<8x16xf32> -> vector<8x16xf32>
      %109 = arith.addf %104, %108 : vector<8x16xf32>
      %110 = vector.extract_strided_slice %12 {offsets = [5, 0, 0], sizes = [1, 8, 4], strides = [1, 1, 1]} : vector<9x8x4xf32> to vector<1x8x4xf32>
      %111 = vector.shape_cast %110 : vector<1x8x4xf32> to vector<8x4xf32>
      %112 = vector.extract_strided_slice %83 {offsets = [0, 5], sizes = [4, 16], strides = [1, 1]} : vector<4x24xf32> to vector<4x16xf32>
      %cst_36 = arith.constant dense<0.000000e+00> : vector<8x16xf32>
      %113 = tpu.matmul %111, %112, %cst_36 {dimension_numbers = #tpu.dot_dimension_numbers<[1], [0], [0], [1], [0, 0, 1, 1], [], []>} : vector<8x4xf32>, vector<4x16xf32>, vector<8x16xf32> -> vector<8x16xf32>
      %114 = arith.addf %109, %113 : vector<8x16xf32>
      %115 = vector.extract_strided_slice %12 {offsets = [6, 0, 0], sizes = [1, 8, 4], strides = [1, 1, 1]} : vector<9x8x4xf32> to vector<1x8x4xf32>
      %116 = vector.shape_cast %115 : vector<1x8x4xf32> to vector<8x4xf32>
      %117 = vector.extract_strided_slice %83 {offsets = [0, 6], sizes = [4, 16], strides = [1, 1]} : vector<4x24xf32> to vector<4x16xf32>
      %cst_37 = arith.constant dense<0.000000e+00> : vector<8x16xf32>
      %118 = tpu.matmul %116, %117, %cst_37 {dimension_numbers = #tpu.dot_dimension_numbers<[1], [0], [0], [1], [0, 0, 1, 1], [], []>} : vector<8x4xf32>, vector<4x16xf32>, vector<8x16xf32> -> vector<8x16xf32>
      %119 = arith.addf %114, %118 : vector<8x16xf32>
      %120 = vector.extract_strided_slice %12 {offsets = [7, 0, 0], sizes = [1, 8, 4], strides = [1, 1, 1]} : vector<9x8x4xf32> to vector<1x8x4xf32>
      %121 = vector.shape_cast %120 : vector<1x8x4xf32> to vector<8x4xf32>
      %122 = vector.extract_strided_slice %83 {offsets = [0, 7], sizes = [4, 16], strides = [1, 1]} : vector<4x24xf32> to vector<4x16xf32>
      %cst_38 = arith.constant dense<0.000000e+00> : vector<8x16xf32>
      %123 = tpu.matmul %121, %122, %cst_38 {dimension_numbers = #tpu.dot_dimension_numbers<[1], [0], [0], [1], [0, 0, 1, 1], [], []>} : vector<8x4xf32>, vector<4x16xf32>, vector<8x16xf32> -> vector<8x16xf32>
      %124 = arith.addf %119, %123 : vector<8x16xf32>
      %125 = vector.extract_strided_slice %12 {offsets = [8, 0, 0], sizes = [1, 8, 4], strides = [1, 1, 1]} : vector<9x8x4xf32> to vector<1x8x4xf32>
      %126 = vector.shape_cast %125 : vector<1x8x4xf32> to vector<8x4xf32>
      %127 = vector.extract_strided_slice %83 {offsets = [0, 8], sizes = [4, 16], strides = [1, 1]} : vector<4x24xf32> to vector<4x16xf32>
      %cst_39 = arith.constant dense<0.000000e+00> : vector<8x16xf32>
      %128 = tpu.matmul %126, %127, %cst_39 {dimension_numbers = #tpu.dot_dimension_numbers<[1], [0], [0], [1], [0, 0, 1, 1], [], []>} : vector<8x4xf32>, vector<4x16xf32>, vector<8x16xf32> -> vector<8x16xf32>
      %129 = arith.addf %124, %128 : vector<8x16xf32>
      %130 = vector.broadcast %13 : vector<8x1xf32> to vector<8x16xf32>
      %131 = arith.addf %129, %130 : vector<8x16xf32>
      %cst_40 = arith.constant 0.000000e+00 : f32
      %132 = vector.broadcast %cst_40 : f32 to vector<8x16xf32>
      %133 = arith.maximumf %131, %132 : vector<8x16xf32>
      %c2_i32_41 = arith.constant 2 : i32
      %134 = arith.muli %arg1, %c2_i32_41 : i32
      %c1_i32_42 = arith.constant 1 : i32
      %135 = arith.addi %134, %c1_i32_42 : i32
      %136 = arith.index_cast %135 : i32 to index
      %c0_43 = arith.constant 0 : index
      %c0_44 = arith.constant 0 : index
      %137 = vector.load %arg8[%136, %c0_43, %c0_44] : memref<2x8x16xf32, #tpu.memory_space<vmem>>, vector<1x8x16xf32>
      %138 = vector.shape_cast %137 : vector<1x8x16xf32> to vector<8x16xf32>
      %139 = vector.shape_cast %133 : vector<8x16xf32> to vector<1x8x16xf32>
      tpu.vector_store %arg8[%136, %c0_43, %c0_44], %139 {strides = array<i32>} : memref<2x8x16xf32, #tpu.memory_space<vmem>>, vector<1x8x16xf32>,
      %cst_45 = arith.constant dense<0.000000e+00> : vector<8xf32>
      %140 = vector.multi_reduction <add>, %133, %cst_45 [1] : vector<8x16xf32> to vector<8xf32>
      %141 = vector.shape_cast %140 : vector<8xf32> to vector<8x1xf32>
      %142 = arith.addf %78, %141 : vector<8x1xf32>
      %c0_46 = arith.constant 0 : index
      %c0_47 = arith.constant 0 : index
      %143 = vector.load %arg9[%c0_46, %c0_47] : memref<8x1xf32, #tpu.memory_space<vmem>>, vector<8x1xf32>
      %144 = arith.addf %143, %142 : vector<8x1xf32>
      %c0_48 = arith.constant 0 : index
      %c0_49 = arith.constant 0 : index
      %145 = vector.load %arg9[%c0_48, %c0_49] : memref<8x1xf32, #tpu.memory_space<vmem>>, vector<8x1xf32>
      tpu.vector_store %arg9[%c0_48, %c0_49], %144 {strides = array<i32>} : memref<8x1xf32, #tpu.memory_space<vmem>>, vector<8x1xf32>,
    } else {
    }
    %c1_i32 = arith.constant 1 : i32
    %3 = arith.cmpi eq, %arg0, %c1_i32 : i32
    %4 = arith.extui %3 : i1 to i32
    %c0_i32_1 = arith.constant 0 : i32
    %5 = arith.cmpi ne, %4, %c0_i32_1 : i32
    scf.if %5 {
      %c0_i32_3 = arith.constant 0 : i32
      %9 = arith.cmpi eq, %arg1, %c0_i32_3 : i32
      %10 = arith.extui %9 : i1 to i32
      %c0_i32_4 = arith.constant 0 : i32
      %11 = arith.cmpi ne, %10, %c0_i32_4 : i32
      scf.if %11 {
        %c0_14 = arith.constant 0 : index
        %c0_15 = arith.constant 0 : index
        %26 = vector.load %arg9[%c0_14, %c0_15] : memref<8x1xf32, #tpu.memory_space<vmem>>, vector<8x1xf32>
        %cst_16 = arith.constant 3.125000e-02 : f32
        %27 = vector.broadcast %cst_16 : f32 to vector<8x1xf32>
        %28 = arith.mulf %26, %27 : vector<8x1xf32>
        %c0_17 = arith.constant 0 : index
        %c0_18 = arith.constant 0 : index
        %29 = vector.load %arg9[%c0_17, %c0_18] : memref<8x1xf32, #tpu.memory_space<vmem>>, vector<8x1xf32>
        tpu.vector_store %arg9[%c0_17, %c0_18], %28 {strides = array<i32>} : memref<8x1xf32, #tpu.memory_space<vmem>>, vector<8x1xf32>,
        %cst_19 = arith.constant 0.000000e+00 : f32
        %30 = vector.broadcast %cst_19 : f32 to vector<8x1xf32>
        %c0_20 = arith.constant 0 : index
        %c0_21 = arith.constant 0 : index
        %31 = vector.load %arg10[%c0_20, %c0_21] : memref<8x1xf32, #tpu.memory_space<vmem>>, vector<8x1xf32>
        tpu.vector_store %arg10[%c0_20, %c0_21], %30 {strides = array<i32>} : memref<8x1xf32, #tpu.memory_space<vmem>>, vector<8x1xf32>,
      } else {
      }
      %c0 = arith.constant 0 : index
      %c0_5 = arith.constant 0 : index
      %12 = vector.load %arg9[%c0, %c0_5] : memref<8x1xf32, #tpu.memory_space<vmem>>, vector<8x1xf32>
      %c2_i32_6 = arith.constant 2 : i32
      %13 = arith.muli %arg1, %c2_i32_6 : i32
      %14 = arith.index_cast %13 : i32 to index
      %c0_7 = arith.constant 0 : index
      %c0_8 = arith.constant 0 : index
      %15 = vector.load %arg8[%14, %c0_7, %c0_8] : memref<2x8x16xf32, #tpu.memory_space<vmem>>, vector<2x8x16xf32>
      %16 = vector.shape_cast %12 : vector<8x1xf32> to vector<1x8x1xf32>
      %17 = vector.broadcast %16 : vector<1x8x1xf32> to vector<2x8x16xf32>
      %18 = arith.subf %15, %17 : vector<2x8x16xf32>
      %19 = arith.mulf %18, %18 : vector<2x8x16xf32>
      %cst = arith.constant dense<0.000000e+00> : vector<2x8xf32>
      %20 = vector.multi_reduction <add>, %19, %cst [2] : vector<2x8x16xf32> to vector<2x8xf32>
      %21 = vector.shape_cast %20 : vector<2x8xf32> to vector<2x8x1xf32>
      %c0_9 = arith.constant 0 : index
      %c0_10 = arith.constant 0 : index
      %22 = vector.load %arg10[%c0_9, %c0_10] : memref<8x1xf32, #tpu.memory_space<vmem>>, vector<8x1xf32>
      %cst_11 = arith.constant dense<0.000000e+00> : vector<8x1xf32>
      %23 = vector.multi_reduction <add>, %21, %cst_11 [0] : vector<2x8x1xf32> to vector<8x1xf32>
      %24 = arith.addf %22, %23 : vector<8x1xf32>
      %c0_12 = arith.constant 0 : index
      %c0_13 = arith.constant 0 : index
      %25 = vector.load %arg10[%c0_12, %c0_13] : memref<8x1xf32, #tpu.memory_space<vmem>>, vector<8x1xf32>
      tpu.vector_store %arg10[%c0_12, %c0_13], %24 {strides = array<i32>} : memref<8x1xf32, #tpu.memory_space<vmem>>, vector<8x1xf32>,
    } else {
    }
    %c2_i32 = arith.constant 2 : i32
    %6 = arith.cmpi eq, %arg0, %c2_i32 : i32
    %7 = arith.extui %6 : i1 to i32
    %c0_i32_2 = arith.constant 0 : i32
    %8 = arith.cmpi ne, %7, %c0_i32_2 : i32
    scf.if %8 {
      %c0_i32_3 = arith.constant 0 : i32
      %9 = arith.cmpi eq, %arg1, %c0_i32_3 : i32
      %10 = arith.extui %9 : i1 to i32
      %c0_i32_4 = arith.constant 0 : i32
      %11 = arith.cmpi ne, %10, %c0_i32_4 : i32
      scf.if %11 {
        %c0_14 = arith.constant 0 : index
        %c0_15 = arith.constant 0 : index
        %24 = vector.load %arg10[%c0_14, %c0_15] : memref<8x1xf32, #tpu.memory_space<vmem>>, vector<8x1xf32>
        %cst = arith.constant 3.125000e-02 : f32
        %25 = vector.broadcast %cst : f32 to vector<8x1xf32>
        %26 = arith.mulf %24, %25 : vector<8x1xf32>
        %cst_16 = arith.constant 9.99999974E-6 : f32
        %27 = vector.broadcast %cst_16 : f32 to vector<8x1xf32>
        %28 = arith.addf %26, %27 : vector<8x1xf32>
        %29 = math.rsqrt %28 : vector<8x1xf32>
        %c0_17 = arith.constant 0 : index
        %c0_18 = arith.constant 0 : index
        %30 = vector.load %arg5[%c0_17, %c0_18] : memref<8x1xf32, #tpu.memory_space<vmem>>, vector<8x1xf32>
        %31 = arith.mulf %30, %29 : vector<8x1xf32>
        %c0_19 = arith.constant 0 : index
        %c0_20 = arith.constant 0 : index
        %32 = vector.load %arg11[%c0_19, %c0_20] : memref<8x1xf32, #tpu.memory_space<vmem>>, vector<8x1xf32>
        tpu.vector_store %arg11[%c0_19, %c0_20], %31 {strides = array<i32>} : memref<8x1xf32, #tpu.memory_space<vmem>>, vector<8x1xf32>,
        %c0_21 = arith.constant 0 : index
        %c0_22 = arith.constant 0 : index
        %33 = vector.load %arg6[%c0_21, %c0_22] : memref<8x1xf32, #tpu.memory_space<vmem>>, vector<8x1xf32>
        %c0_23 = arith.constant 0 : index
        %c0_24 = arith.constant 0 : index
        %34 = vector.load %arg9[%c0_23, %c0_24] : memref<8x1xf32, #tpu.memory_space<vmem>>, vector<8x1xf32>
        %35 = arith.mulf %34, %31 : vector<8x1xf32>
        %36 = arith.subf %33, %35 : vector<8x1xf32>
        %c0_25 = arith.constant 0 : index
        %c0_26 = arith.constant 0 : index
        %37 = vector.load %arg12[%c0_25, %c0_26] : memref<8x1xf32, #tpu.memory_space<vmem>>, vector<8x1xf32>
        tpu.vector_store %arg12[%c0_25, %c0_26], %36 {strides = array<i32>} : memref<8x1xf32, #tpu.memory_space<vmem>>, vector<8x1xf32>,
      } else {
      }
      %c2_i32_5 = arith.constant 2 : i32
      %12 = arith.muli %arg1, %c2_i32_5 : i32
      %13 = arith.index_cast %12 : i32 to index
      %c0 = arith.constant 0 : index
      %c0_6 = arith.constant 0 : index
      %14 = vector.load %arg8[%13, %c0, %c0_6] : memref<2x8x16xf32, #tpu.memory_space<vmem>>, vector<2x8x16xf32>
      %c0_7 = arith.constant 0 : index
      %c0_8 = arith.constant 0 : index
      %15 = vector.load %arg11[%c0_7, %c0_8] : memref<8x1xf32, #tpu.memory_space<vmem>>, vector<8x1xf32>
      %16 = vector.shape_cast %15 : vector<8x1xf32> to vector<1x8x1xf32>
      %17 = vector.broadcast %16 : vector<1x8x1xf32> to vector<2x8x16xf32>
      %18 = arith.mulf %14, %17 : vector<2x8x16xf32>
      %c0_9 = arith.constant 0 : index
      %c0_10 = arith.constant 0 : index
      %19 = vector.load %arg12[%c0_9, %c0_10] : memref<8x1xf32, #tpu.memory_space<vmem>>, vector<8x1xf32>
      %20 = vector.shape_cast %19 : vector<8x1xf32> to vector<1x8x1xf32>
      %21 = vector.broadcast %20 : vector<1x8x1xf32> to vector<2x8x16xf32>
      %22 = arith.addf %18, %21 : vector<2x8x16xf32>
      %c0_11 = arith.constant 0 : index
      %c0_12 = arith.constant 0 : index
      %c0_13 = arith.constant 0 : index
      %23 = vector.load %arg7[%c0_11, %c0_12, %c0_13] : memref<2x8x16xf32, #tpu.memory_space<vmem>>, vector<2x8x16xf32>
      tpu.vector_store %arg7[%c0_11, %c0_12, %c0_13], %22 {strides = array<i32>} : memref<2x8x16xf32, #tpu.memory_space<vmem>>, vector<2x8x16xf32>,
    } else {
    }
    return
  }
  func.func @transform_0(%arg0: i32, %arg1: i32) -> (i32, i32, i32) {
    %c0_i32 = arith.constant 0 : i32
    %0 = arith.cmpi eq, %arg0, %c0_i32 : i32
    %c0_i32_0 = arith.constant 0 : i32
    %1 = arith.select %0, %arg1, %c0_i32_0 : i32
    %c0_i32_1 = arith.constant 0 : i32
    %c0_i32_2 = arith.constant 0 : i32
    %c0_i32_3 = arith.constant 0 : i32
    return %1, %c0_i32_1, %c0_i32_2 : i32, i32, i32
  }
  func.func @transform_1(%arg0: i32, %arg1: i32) -> (i32, i32, i32) {
    %c0_i32 = arith.constant 0 : i32
    %c0_i32_0 = arith.constant 0 : i32
    %c0_i32_1 = arith.constant 0 : i32
    %c0_i32_2 = arith.constant 0 : i32
    return %c0_i32, %c0_i32_0, %c0_i32_1 : i32, i32, i32
  }
  func.func @transform_2(%arg0: i32, %arg1: i32) -> (i32, i32) {
    %c0_i32 = arith.constant 0 : i32
    %c0_i32_0 = arith.constant 0 : i32
    %c0_i32_1 = arith.constant 0 : i32
    return %c0_i32, %c0_i32_0 : i32, i32
  }
  func.func @transform_3(%arg0: i32, %arg1: i32) -> (i32, i32) {
    %c0_i32 = arith.constant 0 : i32
    %c0_i32_0 = arith.constant 0 : i32
    %c0_i32_1 = arith.constant 0 : i32
    return %c0_i32, %c0_i32_0 : i32, i32
  }
  func.func @transform_4(%arg0: i32, %arg1: i32) -> (i32, i32) {
    %c0_i32 = arith.constant 0 : i32
    %c0_i32_0 = arith.constant 0 : i32
    %c0_i32_1 = arith.constant 0 : i32
    return %c0_i32, %c0_i32_0 : i32, i32
  }
  func.func @transform_5(%arg0: i32, %arg1: i32) -> (i32, i32, i32) {
    %c2_i32 = arith.constant 2 : i32
    %0 = arith.cmpi eq, %arg0, %c2_i32 : i32
    %c0_i32 = arith.constant 0 : i32
    %1 = arith.select %0, %arg1, %c0_i32 : i32
    %c0_i32_0 = arith.constant 0 : i32
    %c0_i32_1 = arith.constant 0 : i32
    %c0_i32_2 = arith.constant 0 : i32
    return %1, %c0_i32_0, %c0_i32_1 : i32, i32, i32
  }
}

</mosaic_0001>

<llo_original>
// kernel: basic_block_forward.1
$region0: #{basic_block_forward.1}
  #allocation0 [shape = 'u32[]', space=smem, size = 0x4, offset = 0x4, fixed_abs, tag = 'smem constant byte address 0x4 - core index']
  #allocation1 [shape = 'u32[72,128]{1,0:T(1,128)}', space=vmem, size = 0x9000, scoped, tag = 'internal scratch']
  #allocation2 [shape = 'f32[2,8,16]{2,1,0:T(8,128)}', space=vmem, size = 0x2000, scoped, tag = 'scratch operand']
  #allocation3 [shape = 'f32[8,1]{1,0:T(8,128)}', space=vmem, size = 0x1000, scoped, tag = 'scratch operand']
  #allocation4 [shape = 'f32[8,1]{1,0:T(8,128)}', space=vmem, size = 0x1000, scoped, tag = 'scratch operand']
  #allocation5 [shape = 'f32[8,1]{1,0:T(8,128)}', space=vmem, size = 0x1000, scoped, tag = 'scratch operand']
  #allocation6 [shape = 'f32[8,1]{1,0:T(8,128)}', space=vmem, size = 0x1000, scoped, tag = 'scratch operand']
  %s0 = inlined_call_operand.vmem [shape: f32[2,4,16], index: 0, kind: input, shape index: {}]
  %s1 = inlined_call_operand.vmem [shape: f32[9,8,4], index: 1, kind: input, shape index: {}]
  %s2 = inlined_call_operand.vmem [shape: f32[8,1], index: 2, kind: input, shape index: {}]
  %s3 = inlined_call_operand.vmem [shape: f32[8,1], index: 3, kind: input, shape index: {}]
  %s4 = inlined_call_operand.vmem [shape: f32[8,1], index: 4, kind: input, shape index: {}]
  %s5 = inlined_call_operand.hbm [shape: f32[2,8,16], index: 5, kind: output, shape index: {}]
  %s6 = sld [smem:[#allocation0]]
  $region77: #{basic_block_forward.1} parent=0
    _
  %s8 = ssub.s32 1, %s6
  %s9 = scalar_select 0, %s8, %s6
  $region1: #{basic_block_forward.1} parent=0
    #allocation7 [shape = 'u8[16384]{0}', space=vmem, size = 0x4000, scoped, tag = 'output window, operand 0']
    #allocation8 [shape = 's32[2]{0}', space=sflag, size = 0x8, scoped, tag = 'scoped memory for basic_block_forward.1']
    %10 = vsyncpa [#allocation8], 0
    %s11 = scalar_lea.sflag [#allocation8], 1
    %12 = vsyncpa %s11, 0
    loop: start=0, step=1, limit=5
    $region2: #{basic_block_forward.1} parent=1 // loop_pre_header
      _
    $region3: #{basic_block_forward.1} parent=1 // loop_header
      %s14 = sphi 0, %s18
      %p15 = scmp.ge.s32.totalorder %s14, 5
      %s21 = sphi 0, %s33
      %s22 = sphi 0, %s29
      %s23 = sphi 0, %s21
      %s24 = sphi 0, %s22
      %s25 = sphi 0, %s23
      %s26 = sphi 0, %s24
      %s40 = sphi 0, %s42
      %s43 = sphi 0, %s40
      %s44 = sphi 0, %s43
      %s60 = sphi 0, %s44
      %s64 = sphi 0, %s64
      %s66 = sphi 0, %s64
      %s67 = sphi 0, %s66
      %s81 = sphi 0, %s67
      %s85 = sphi 0, %s85
      %s87 = sphi 0, %s85
      %s88 = sphi 0, %s87
      %s102 = sphi 0, %s88
      %s106 = sphi 0, %s106
      %s108 = sphi 0, %s106
      %s109 = sphi 0, %s108
      %s123 = sphi 0, %s109
      %s127 = sphi 0, %s127
      %s129 = sphi 0, %s127
      %s130 = sphi 0, %s129
      %s144 = sphi 0, %s130
      %s154 = sphi 0, %s156
      %s157 = sphi 0, %s154
      %s158 = sphi 0, %s157
      %s174 = sphi 0, %s158
    $region4: #{basic_block_forward.1} parent=1 // loop_header_branch
      %17 = sbr.rel (%p15) target = $region8
    $region5: #{basic_block_forward.1} parent=1 // loop_body
      %s19 = ssub.s32 %s14, 1
      %s20 = ssub.s32 %s14, 2
      %s27 = sadd.s32 1, %s22
      %p28 = scmp.ge.s32.totalorder %s27, 1
      %s29 = scalar_select %p28, 0, %s27
      %s30 = sadd.s32 1, %s21
      %s31 = scalar_select %p28, %s30, %s21
      %p32 = scmp.ge.s32.totalorder %s31, 3
      %s33 = scalar_select %p32, 0, %s31
      %p34 = scmp.eq.s32.totalorder %s21, 0
      %s35 = scalar_select %p34, %s22, 0
      %p36 = scmp.eq.s32.totalorder %s33, 0
      %s37 = scalar_select %p36, %s29, 0
      %s38 = ssub.s32 %s35, %s37
      %p39 = scmp.eq.s32.totalorder %s38, 0
      %s41 = sadd.s32 %s40, 1
      %s42 = scalar_select %p39, %s40, %s41
      %p45 = pneg %p39
      %p46 = scmp.eq.s32.totalorder %s14, 2
      %p47 = por %p45, %p46
      %p48 = scmp.ne.s32.totalorder %s40, %s43
      %p49 = scmp.eq.s32.totalorder %s14, 0
      %p50 = por %p48, %p49
      %p51 = scmp.ne.s32.totalorder %s40, %s43
      %p52 = scmp.eq.s32.totalorder %s19, 2
      %p53 = por %p51, %p52
      %p54 = scmp.ne.s32.totalorder %s43, %s44
      %p55 = scmp.eq.s32.totalorder %s19, 0
      %p56 = por %p54, %p55
      %p57 = scmp.ne.s32.totalorder %s43, %s44
      %p58 = scmp.eq.s32.totalorder %s20, 2
      %p59 = por %p57, %p58
      %p61 = scmp.ne.s32.totalorder %s44, %s60
      %p62 = scmp.eq.s32.totalorder %s20, 0
      %p63 = por %p61, %p62
      %s65 = sadd.s32 %s64, 1
      %p68 = scmp.eq.s32.totalorder %s14, 2
      %p69 = scmp.ne.s32.totalorder %s64, %s66
      %p70 = scmp.eq.s32.totalorder %s14, 0
      %p71 = por %p69, %p70
      %p72 = scmp.ne.s32.totalorder %s64, %s66
      %p73 = scmp.eq.s32.totalorder %s19, 2
      %p74 = por %p72, %p73
      %p75 = scmp.ne.s32.totalorder %s66, %s67
      %p76 = scmp.eq.s32.totalorder %s19, 0
      %p77 = por %p75, %p76
      %p78 = scmp.ne.s32.totalorder %s66, %s67
      %p79 = scmp.eq.s32.totalorder %s20, 2
      %p80 = por %p78, %p79
      %p82 = scmp.ne.s32.totalorder %s67, %s81
      %p83 = scmp.eq.s32.totalorder %s20, 0
      %p84 = por %p82, %p83
      %s86 = sadd.s32 %s85, 1
      %p89 = scmp.eq.s32.totalorder %s14, 2
      %p90 = scmp.ne.s32.totalorder %s85, %s87
      %p91 = scmp.eq.s32.totalorder %s14, 0
      %p92 = por %p90, %p91
      %p93 = scmp.ne.s32.totalorder %s85, %s87
      %p94 = scmp.eq.s32.totalorder %s19, 2
      %p95 = por %p93, %p94
      %p96 = scmp.ne.s32.totalorder %s87, %s88
      %p97 = scmp.eq.s32.totalorder %s19, 0
      %p98 = por %p96, %p97
      %p99 = scmp.ne.s32.totalorder %s87, %s88
      %p100 = scmp.eq.s32.totalorder %s20, 2
      %p101 = por %p99, %p100
      %p103 = scmp.ne.s32.totalorder %s88, %s102
      %p104 = scmp.eq.s32.totalorder %s20, 0
      %p105 = por %p103, %p104
      %s107 = sadd.s32 %s106, 1
      %p110 = scmp.eq.s32.totalorder %s14, 2
      %p111 = scmp.ne.s32.totalorder %s106, %s108
      %p112 = scmp.eq.s32.totalorder %s14, 0
      %p113 = por %p111, %p112
      %p114 = scmp.ne.s32.totalorder %s106, %s108
      %p115 = scmp.eq.s32.totalorder %s19, 2
      %p116 = por %p114, %p115
      %p117 = scmp.ne.s32.totalorder %s108, %s109
      %p118 = scmp.eq.s32.totalorder %s19, 0
      %p119 = por %p117, %p118
      %p120 = scmp.ne.s32.totalorder %s108, %s109
      %p121 = scmp.eq.s32.totalorder %s20, 2
      %p122 = por %p120, %p121
      %p124 = scmp.ne.s32.totalorder %s109, %s123
      %p125 = scmp.eq.s32.totalorder %s20, 0
      %p126 = por %p124, %p125
      %s128 = sadd.s32 %s127, 1
      %p131 = scmp.eq.s32.totalorder %s14, 2
      %p132 = scmp.ne.s32.totalorder %s127, %s129
      %p133 = scmp.eq.s32.totalorder %s14, 0
      %p134 = por %p132, %p133
      %p135 = scmp.ne.s32.totalorder %s127, %s129
      %p136 = scmp.eq.s32.totalorder %s19, 2
      %p137 = por %p135, %p136
      %p138 = scmp.ne.s32.totalorder %s129, %s130
      %p139 = scmp.eq.s32.totalorder %s19, 0
      %p140 = por %p138, %p139
      %p141 = scmp.ne.s32.totalorder %s129, %s130
      %p142 = scmp.eq.s32.totalorder %s20, 2
      %p143 = por %p141, %p142
      %p145 = scmp.ne.s32.totalorder %s130, %s144
      %p146 = scmp.eq.s32.totalorder %s20, 0
      %p147 = por %p145, %p146
      %p148 = scmp.eq.s32.totalorder %s21, 2
      %s149 = scalar_select %p148, %s22, 0
      %p150 = scmp.eq.s32.totalorder %s33, 2
      %s151 = scalar_select %p150, %s29, 0
      %s152 = ssub.s32 %s149, %s151
      %p153 = scmp.eq.s32.totalorder %s152, 0
      %s155 = sadd.s32 %s154, 1
      %s156 = scalar_select %p153, %s154, %s155
      %p159 = pneg %p153
      %p160 = scmp.eq.s32.totalorder %s14, 2
      %p161 = por %p159, %p160
      %p162 = scmp.ne.s32.totalorder %s154, %s157
      %p163 = scmp.eq.s32.totalorder %s14, 0
      %p164 = por %p162, %p163
      %p165 = scmp.ne.s32.totalorder %s154, %s157
      %p166 = scmp.eq.s32.totalorder %s19, 2
      %p167 = por %p165, %p166
      %p168 = scmp.ne.s32.totalorder %s157, %s158
      %p169 = scmp.eq.s32.totalorder %s19, 0
      %p170 = por %p168, %p169
      %p171 = scmp.ne.s32.totalorder %s157, %s158
      %p172 = scmp.eq.s32.totalorder %s20, 2
      %p173 = por %p171, %p172
      %p175 = scmp.ne.s32.totalorder %s158, %s174
      %p176 = scmp.eq.s32.totalorder %s20, 0
      %p177 = por %p175, %p176
      %p178 = scmp.le.s32.totalorder 1, %s14
      %p179 = scmp.lt.s32.totalorder %s14, 4
      %p180 = pnand %p178, %p179
      %p181 = pneg %p180
      // Predicated region
      $region9: #{basic_block_forward.1} parent=5 // pred_check
        _
      $region10: #{basic_block_forward.1} parent=5 // pred_check_branch
        %183 = sbr.rel (%p180) target = $region12
      $region11: #{basic_block_forward.1} parent=5 // pred_region
        %s184 = ssub.s32 %s14, 1
        // Predicated region
        $region13: #{basic_block_forward.1} parent=11 // pred_check
          %p185 = pneg %p77
        $region14: #{basic_block_forward.1} parent=11 // pred_check_branch
          %187 = sbr.rel (%p185) target = $region16
        $region15: #{basic_block_forward.1} parent=11 // pred_region
          _
        $region16: #{basic_block_forward.1} parent=11 // pred_fallthru
          _
        // Predicated region
        $region17: #{basic_block_forward.1} parent=11 // pred_check
          %p188 = pneg %p98
        $region18: #{basic_block_forward.1} parent=11 // pred_check_branch
          %190 = sbr.rel (%p188) target = $region20
        $region19: #{basic_block_forward.1} parent=11 // pred_region
          _
        $region20: #{basic_block_forward.1} parent=11 // pred_fallthru
          _
        // Predicated region
        $region21: #{basic_block_forward.1} parent=11 // pred_check
          %p191 = pneg %p119
        $region22: #{basic_block_forward.1} parent=11 // pred_check_branch
          %193 = sbr.rel (%p191) target = $region24
        $region23: #{basic_block_forward.1} parent=11 // pred_region
          _
        $region24: #{basic_block_forward.1} parent=11 // pred_fallthru
          _
        // Predicated region
        $region25: #{basic_block_forward.1} parent=11 // pred_check
          %p194 = pneg %p140
        $region26: #{basic_block_forward.1} parent=11 // pred_check_branch
          %196 = sbr.rel (%p194) target = $region28
        $region27: #{basic_block_forward.1} parent=11 // pred_region
          _
        $region28: #{basic_block_forward.1} parent=11 // pred_fallthru
          _
      $region12: #{basic_block_forward.1} parent=5 // pred_fallthru
        _
      %p197 = scmp.lt.s32.totalorder %s14, 3
      // Predicated region
      $region29: #{basic_block_forward.1} parent=5 // pred_check
        %p198 = pneg %p197
      $region30: #{basic_block_forward.1} parent=5 // pred_check_branch
        %200 = sbr.rel (%p198) target = $region32
      $region31: #{basic_block_forward.1} parent=5 // pred_region
        // Predicated region
        $region33: #{basic_block_forward.1} parent=31 // pred_check
          %p201 = pneg %p50
        $region34: #{basic_block_forward.1} parent=31 // pred_check_branch
          %203 = sbr.rel (%p201) target = $region36
        $region35: #{basic_block_forward.1} parent=31 // pred_region
          %p204 = scmp.eq.s32.totalorder %s21, 0
          %s205 = scalar_select %p204, %s22, 0
          %s206 = smul.u32 2, %s205
          %p207 = scmp.lt.s32.totalorder %s206, 1
          %s208 = scalar_select %p207, %s206, 1
          %s209 = smul.addr %s208, 4
          %s210 = scalar_lea.vmem %s0, %s209
          %p211 = scmp.eq.s32.totalorder %s21, 0
          %s212 = scalar_select %p211, %s22, 0
          %s213 = smul.u32 2, %s212
        $region36: #{basic_block_forward.1} parent=31 // pred_fallthru
          _
      $region32: #{basic_block_forward.1} parent=5 // pred_fallthru
        _
      %p214 = scmp.le.s32.totalorder 1, %s14
      %p215 = scmp.lt.s32.totalorder %s14, 4
      %p216 = pnand %p214, %p215
      %p217 = pneg %p216
      // Predicated region
      $region37: #{basic_block_forward.1} parent=5 // pred_check
        _
      $region38: #{basic_block_forward.1} parent=5 // pred_check_branch
        %219 = sbr.rel (%p216) target = $region40
      $region39: #{basic_block_forward.1} parent=5 // pred_region
        %s220 = ssub.s32 %s14, 1
        %p221 = scmp.eq.s32.totalorder %s23, 0
        %s222 = scalar_select %p221, %s24, 0
        %s223 = smul.u32 2, %s222
        %p224 = scmp.lt.s32.totalorder %s223, 1
        %s225 = scalar_select %p224, %s223, 1
        %s226 = smul.addr %s225, 4
        %s227 = scalar_lea.vmem %s0, %s226
        %p228 = pneg %p56
        %p229 = pneg %p53
        %p230 = pneg %p77
        %p231 = pneg %p74
        %p232 = pneg %p98
        %p233 = pneg %p95
        %p234 = pneg %p119
        %p235 = pneg %p116
        %p236 = pneg %p140
        %p237 = pneg %p137
        %p238 = pneg %p170
        %p239 = pneg %p167
        %s240 = sand.u32 %s157, 1
        %s241 = scalar_lea.sflag [#allocation8], %s240
        %s242 = sand.u32 %s157, 1
        %s243 = smul.addr %s242, 16
        %s244 = scalar_lea.vmem [#allocation7], %s243
        %p245 = scmp.eq.s32.totalorder %s23, 0
        %s246 = scalar_select %p245, %s24, 0
        %s247 = smul.u32 2, %s246
        %p248 = scmp.lt.s32.totalorder %s247, 1
        %s249 = scalar_select %p248, %s247, 1
        %s250 = smul.addr %s249, 4
        %s251 = scalar_lea.vmem %s0, %s250
        %p252 = scmp.eq.s32.totalorder %s23, 0
        %s253 = scalar_select %p252, %s24, 0
        %s254 = smul.u32 2, %s253
        %p255 = scmp.eq.s32.totalorder %s23, 2
        %s256 = scalar_select %p255, %s24, 0
        %s257 = smul.u32 2, %s256
        %p258 = scmp.eq.s32.totalorder %s23, 0
        // Predicated region
        $region41: #{basic_block_forward.1} parent=39 // pred_check
          %p259 = pneg %p258
        $region42: #{basic_block_forward.1} parent=39 // pred_check_branch
          %261 = sbr.rel (%p259) target = $region44
        $region43: #{basic_block_forward.1} parent=39 // pred_region
          %p262 = scmp.eq.s32.totalorder %s24, 0
          // Predicated region
          $region45: #{basic_block_forward.1} parent=43 // pred_check
            %p263 = pneg %p262
          $region46: #{basic_block_forward.1} parent=43 // pred_check_branch
            %265 = sbr.rel (%p263) target = $region48
          $region47: #{basic_block_forward.1} parent=43 // pred_region
            %vm266 = vcmask 7168
            %267 = vst.msk [vmem:[#allocation3] sm:$0xff] %vm266, 0.0
          $region48: #{basic_block_forward.1} parent=43 // pred_fallthru
            _
          %v268 = vld [vmem:[%s1] sm:$0xff]
          %v269 = vld [vmem:[%s1 + $0x8] sm:$0xff]
          %v270 = vld [vmem:[%s1 + $0x10] sm:$0xff]
          %v271 = vld [vmem:[%s1 + $0x18] sm:$0xff]
          %v272 = vld [vmem:[%s1 + $0x20] sm:$0xff]
          %v273 = vld [vmem:[%s1 + $0x28] sm:$0xff]
          %v274 = vld [vmem:[%s1 + $0x30] sm:$0xff]
          %v275 = vld [vmem:[%s1 + $0x38] sm:$0xff]
          %v276 = vld [vmem:[%s1 + $0x40] sm:$0xff]
          %v277 = vld [vmem:[%s2] sm:$0xff]
          %v278 = vld [vmem:[%s251] sm:$0xf]
          %280 = vrot.lane.b32.xlu0 %v278, 116
          %v281 = vpop.permute.xlu0 %280
          %283 = vrot.lane.b32.xlu0 %v278, 4
          %v284 = vpop.permute.xlu0 %283
          %286 = vrot.lane.b32.xlu0 %v278, 20
          %v287 = vpop.permute.xlu0 %286
          %vm289 = vcmask 31744
          %v290 = vsel %vm289, %v281, %v284
          %vm291 = vcmask 162816
          %v292 = vsel %vm291, %v290, %v287
          %294 = vrot.lane.b32.xlu0 %v292, 127
          %v295 = vpop.permute.xlu0 %294
          %v297 = vsel %vm289, %v269, 0
          %vm299 = vcmask 1043456
          %v300 = vsel %vm299, %v295, 0
          %302 = vmatpush.msra.mxu0 0.0
          %303 = vmatpush.msra.mxu0 0.0
          %304 = vmatpush.msra.mxu0 0.0
          %305 = vmatpush.msra.mxu0 0.0
          %306 = vmatpush.msra.mxu0 0.0
          %307 = vmatpush.msra.mxu0 0.0
          %308 = vmatpush.msra.mxu0 0.0
          %309 = vmatpush.msra.mxu0 0.0
          %310 = vmatpush.msra.mxu0 0.0
          %311 = vmatpush.msra.mxu0 0.0
          %312 = vmatpush.msra.mxu0 0.0
          %313 = vmatpush.msra.mxu0 0.0
          %314 = vmatpush.msra.mxu0 0.0
          %315 = vmatpush.msra.mxu0 0.0
          %316 = vmatpush.msra.mxu0 0.0
          %317 = vmatpush.msra.mxu0 %v300
          %318 = vmatmul.f32.gmra.mxu0 %v297
          %v319 = vpop.f32.mrf.mxu0
          %v320 = vadd.f32 0.0, %v319
          %321 = vdwg.mxu0
          %v323 = vsel %vm289, %v268, 0
          %v325 = vsel %vm299, %v292, 0
          %327 = vmatpush.msra.mxu0 0.0
          %328 = vmatpush.msra.mxu0 0.0
          %329 = vmatpush.msra.mxu0 0.0
          %330 = vmatpush.msra.mxu0 0.0
          %331 = vmatpush.msra.mxu0 0.0
          %332 = vmatpush.msra.mxu0 0.0
          %333 = vmatpush.msra.mxu0 0.0
          %334 = vmatpush.msra.mxu0 0.0
          %335 = vmatpush.msra.mxu0 0.0
          %336 = vmatpush.msra.mxu0 0.0
          %337 = vmatpush.msra.mxu0 0.0
          %338 = vmatpush.msra.mxu0 0.0
          %339 = vmatpush.msra.mxu0 0.0
          %340 = vmatpush.msra.mxu0 0.0
          %341 = vmatpush.msra.mxu0 0.0
          %342 = vmatpush.msra.mxu0 %v325
          %343 = vmatmul.f32.gmra.mxu0 %v323
          %v344 = vpop.f32.mrf.mxu0
          %v345 = vadd.f32 %v320, %v344
          %346 = vdwg.mxu0
          %347 = vrot.lane.b32.xlu0 %v292, 126
          %v348 = vpop.permute.xlu0 %347
          %v350 = vsel %vm289, %v270, 0
          %v352 = vsel %vm299, %v348, 0
          %354 = vmatpush.msra.mxu0 0.0
          %355 = vmatpush.msra.mxu0 0.0
          %356 = vmatpush.msra.mxu0 0.0
          %357 = vmatpush.msra.mxu0 0.0
          %358 = vmatpush.msra.mxu0 0.0
          %359 = vmatpush.msra.mxu0 0.0
          %360 = vmatpush.msra.mxu0 0.0
          %361 = vmatpush.msra.mxu0 0.0
          %362 = vmatpush.msra.mxu0 0.0
          %363 = vmatpush.msra.mxu0 0.0
          %364 = vmatpush.msra.mxu0 0.0
          %365 = vmatpush.msra.mxu0 0.0
          %366 = vmatpush.msra.mxu0 0.0
          %367 = vmatpush.msra.mxu0 0.0
          %368 = vmatpush.msra.mxu0 0.0
          %369 = vmatpush.msra.mxu0 %v352
          %370 = vmatmul.f32.gmra.mxu0 %v350
          %v371 = vpop.f32.mrf.mxu0
          %v372 = vadd.f32 0.0, %v371
          %373 = vdwg.mxu0
          %v374 = vadd.f32 %v345, %v372
          %375 = vrot.lane.b32.xlu0 %v292, 125
          %v376 = vpop.permute.xlu0 %375
          %v378 = vsel %vm289, %v271, 0
          %v380 = vsel %vm299, %v376, 0
          %382 = vmatpush.msra.mxu0 0.0
          %383 = vmatpush.msra.mxu0 0.0
          %384 = vmatpush.msra.mxu0 0.0
          %385 = vmatpush.msra.mxu0 0.0
          %386 = vmatpush.msra.mxu0 0.0
          %387 = vmatpush.msra.mxu0 0.0
          %388 = vmatpush.msra.mxu0 0.0
          %389 = vmatpush.msra.mxu0 0.0
          %390 = vmatpush.msra.mxu0 0.0
          %391 = vmatpush.msra.mxu0 0.0
          %392 = vmatpush.msra.mxu0 0.0
          %393 = vmatpush.msra.mxu0 0.0
          %394 = vmatpush.msra.mxu0 0.0
          %395 = vmatpush.msra.mxu0 0.0
          %396 = vmatpush.msra.mxu0 0.0
          %397 = vmatpush.msra.mxu0 %v380
          %398 = vmatmul.f32.gmra.mxu0 %v378
          %v399 = vpop.f32.mrf.mxu0
          %v400 = vadd.f32 0.0, %v399
          %401 = vdwg.mxu0
          %v402 = vadd.f32 %v374, %v400
          %403 = vrot.lane.b32.xlu0 %v292, 124
          %v404 = vpop.permute.xlu0 %403
          %v406 = vsel %vm289, %v272, 0
          %v408 = vsel %vm299, %v404, 0
          %410 = vmatpush.msra.mxu0 0.0
          %411 = vmatpush.msra.mxu0 0.0
          %412 = vmatpush.msra.mxu0 0.0
          %413 = vmatpush.msra.mxu0 0.0
          %414 = vmatpush.msra.mxu0 0.0
          %415 = vmatpush.msra.mxu0 0.0
          %416 = vmatpush.msra.mxu0 0.0
          %417 = vmatpush.msra.mxu0 0.0
          %418 = vmatpush.msra.mxu0 0.0
          %419 = vmatpush.msra.mxu0 0.0
          %420 = vmatpush.msra.mxu0 0.0
          %421 = vmatpush.msra.mxu0 0.0
          %422 = vmatpush.msra.mxu0 0.0
          %423 = vmatpush.msra.mxu0 0.0
          %424 = vmatpush.msra.mxu0 0.0
          %425 = vmatpush.msra.mxu0 %v408
          %426 = vmatmul.f32.gmra.mxu0 %v406
          %v427 = vpop.f32.mrf.mxu0
          %v428 = vadd.f32 0.0, %v427
          %429 = vdwg.mxu0
          %v430 = vadd.f32 %v402, %v428
          %431 = vrot.lane.b32.xlu0 %v292, 123
          %v432 = vpop.permute.xlu0 %431
          %v434 = vsel %vm289, %v273, 0
          %v436 = vsel %vm299, %v432, 0
          %438 = vmatpush.msra.mxu0 0.0
          %439 = vmatpush.msra.mxu0 0.0
          %440 = vmatpush.msra.mxu0 0.0
          %441 = vmatpush.msra.mxu0 0.0
          %442 = vmatpush.msra.mxu0 0.0
          %443 = vmatpush.msra.mxu0 0.0
          %444 = vmatpush.msra.mxu0 0.0
          %445 = vmatpush.msra.mxu0 0.0
          %446 = vmatpush.msra.mxu0 0.0
          %447 = vmatpush.msra.mxu0 0.0
          %448 = vmatpush.msra.mxu0 0.0
          %449 = vmatpush.msra.mxu0 0.0
          %450 = vmatpush.msra.mxu0 0.0
          %451 = vmatpush.msra.mxu0 0.0
          %452 = vmatpush.msra.mxu0 0.0
          %453 = vmatpush.msra.mxu0 %v436
          %454 = vmatmul.f32.gmra.mxu0 %v434
          %v455 = vpop.f32.mrf.mxu0
          %v456 = vadd.f32 0.0, %v455
          %457 = vdwg.mxu0
          %v458 = vadd.f32 %v430, %v456
          %459 = vrot.lane.b32.xlu0 %v292, 122
          %v460 = vpop.permute.xlu0 %459
          %v462 = vsel %vm289, %v274, 0
          %v464 = vsel %vm299, %v460, 0
          %466 = vmatpush.msra.mxu0 0.0
          %467 = vmatpush.msra.mxu0 0.0
          %468 = vmatpush.msra.mxu0 0.0
          %469 = vmatpush.msra.mxu0 0.0
          %470 = vmatpush.msra.mxu0 0.0
          %471 = vmatpush.msra.mxu0 0.0
          %472 = vmatpush.msra.mxu0 0.0
          %473 = vmatpush.msra.mxu0 0.0
          %474 = vmatpush.msra.mxu0 0.0
          %475 = vmatpush.msra.mxu0 0.0
          %476 = vmatpush.msra.mxu0 0.0
          %477 = vmatpush.msra.mxu0 0.0
          %478 = vmatpush.msra.mxu0 0.0
          %479 = vmatpush.msra.mxu0 0.0
          %480 = vmatpush.msra.mxu0 0.0
          %481 = vmatpush.msra.mxu0 %v464
          %482 = vmatmul.f32.gmra.mxu0 %v462
          %v483 = vpop.f32.mrf.mxu0
          %v484 = vadd.f32 0.0, %v483
          %485 = vdwg.mxu0
          %v486 = vadd.f32 %v458, %v484
          %487 = vrot.lane.b32.xlu0 %v292, 121
          %v488 = vpop.permute.xlu0 %487
          %v490 = vsel %vm289, %v275, 0
          %v492 = vsel %vm299, %v488, 0
          %494 = vmatpush.msra.mxu0 0.0
          %495 = vmatpush.msra.mxu0 0.0
          %496 = vmatpush.msra.mxu0 0.0
          %497 = vmatpush.msra.mxu0 0.0
          %498 = vmatpush.msra.mxu0 0.0
          %499 = vmatpush.msra.mxu0 0.0
          %500 = vmatpush.msra.mxu0 0.0
          %501 = vmatpush.msra.mxu0 0.0
          %502 = vmatpush.msra.mxu0 0.0
          %503 = vmatpush.msra.mxu0 0.0
          %504 = vmatpush.msra.mxu0 0.0
          %505 = vmatpush.msra.mxu0 0.0
          %506 = vmatpush.msra.mxu0 0.0
          %507 = vmatpush.msra.mxu0 0.0
          %508 = vmatpush.msra.mxu0 0.0
          %509 = vmatpush.msra.mxu0 %v492
          %510 = vmatmul.f32.gmra.mxu0 %v490
          %v511 = vpop.f32.mrf.mxu0
          %v512 = vadd.f32 0.0, %v511
          %513 = vdwg.mxu0
          %v514 = vadd.f32 %v486, %v512
          %515 = vrot.lane.b32.xlu0 %v292, 120
          %v516 = vpop.permute.xlu0 %515
          %v518 = vsel %vm289, %v276, 0
          %v520 = vsel %vm299, %v516, 0
          %522 = vmatpush.msra.mxu0 0.0
          %523 = vmatpush.msra.mxu0 0.0
          %524 = vmatpush.msra.mxu0 0.0
          %525 = vmatpush.msra.mxu0 0.0
          %526 = vmatpush.msra.mxu0 0.0
          %527 = vmatpush.msra.mxu0 0.0
          %528 = vmatpush.msra.mxu0 0.0
          %529 = vmatpush.msra.mxu0 0.0
          %530 = vmatpush.msra.mxu0 0.0
          %531 = vmatpush.msra.mxu0 0.0
          %532 = vmatpush.msra.mxu0 0.0
          %533 = vmatpush.msra.mxu0 0.0
          %534 = vmatpush.msra.mxu0 0.0
          %535 = vmatpush.msra.mxu0 0.0
          %536 = vmatpush.msra.mxu0 0.0
          %537 = vmatpush.msra.mxu0 %v520
          %538 = vmatmul.f32.gmra.mxu0 %v518
          %v539 = vpop.f32.mrf.mxu0
          %v540 = vadd.f32 0.0, %v539
          %541 = vdwg.mxu0
          %v542 = vadd.f32 %v514, %v540
          %544 = vset.pattern.permute.xlu0 0
          %545 = vperm.xlu0 %544, %v277
          %v546 = vpop.permute.xlu0 %545
          %v548 = vadd.f32 %v542, %v546
          %v549 = vmax.f32 %v548, 0.0
          %s550 = smul.u32 %s24, 2
          %s551 = smul.u32 %s550, 8
          %s552 = scalar_lea.vmem [#allocation2], %s551
          %vm553 = vcmask 130048
          %554 = vst.msk [vmem:[%s552] sm:$0xff] %vm553, %v549
          %v555 = vsel %vm553, %v549, 0.0
          %556 = vadd.xlane.f32.xlu0 %v555
          %v557 = vpop.xlane.xlu0 %556
          %v558 = vadd.f32 %v557, 0.0
          %s559 = scalar_lea.vmem %s251, 4
          %v560 = vld [vmem:[%s559] sm:$0xf]
          %562 = vrot.lane.b32.xlu0 %v560, 116
          %v563 = vpop.permute.xlu0 %562
          %565 = vrot.lane.b32.xlu0 %v560, 4
          %v566 = vpop.permute.xlu0 %565
          %568 = vrot.lane.b32.xlu0 %v560, 20
          %v569 = vpop.permute.xlu0 %568
          %v571 = vsel %vm289, %v563, %v566
          %v572 = vsel %vm291, %v571, %v569
          %574 = vrot.lane.b32.xlu0 %v572, 127
          %v575 = vpop.permute.xlu0 %574
          %v576 = vsel %vm299, %v575, 0
          %578 = vmatpush.msra.mxu0 0.0
          %579 = vmatpush.msra.mxu0 0.0
          %580 = vmatpush.msra.mxu0 0.0
          %581 = vmatpush.msra.mxu0 0.0
          %582 = vmatpush.msra.mxu0 0.0
          %583 = vmatpush.msra.mxu0 0.0
          %584 = vmatpush.msra.mxu0 0.0
          %585 = vmatpush.msra.mxu0 0.0
          %586 = vmatpush.msra.mxu0 0.0
          %587 = vmatpush.msra.mxu0 0.0
          %588 = vmatpush.msra.mxu0 0.0
          %589 = vmatpush.msra.mxu0 0.0
          %590 = vmatpush.msra.mxu0 0.0
          %591 = vmatpush.msra.mxu0 0.0
          %592 = vmatpush.msra.mxu0 0.0
          %593 = vmatpush.msra.mxu0 %v576
          %594 = vmatmul.f32.gmra.mxu0 %v297
          %v595 = vpop.f32.mrf.mxu0
          %v596 = vadd.f32 0.0, %v595
          %597 = vdwg.mxu0
          %v598 = vsel %vm299, %v572, 0
          %600 = vmatpush.msra.mxu0 0.0
          %601 = vmatpush.msra.mxu0 0.0
          %602 = vmatpush.msra.mxu0 0.0
          %603 = vmatpush.msra.mxu0 0.0
          %604 = vmatpush.msra.mxu0 0.0
          %605 = vmatpush.msra.mxu0 0.0
          %606 = vmatpush.msra.mxu0 0.0
          %607 = vmatpush.msra.mxu0 0.0
          %608 = vmatpush.msra.mxu0 0.0
          %609 = vmatpush.msra.mxu0 0.0
          %610 = vmatpush.msra.mxu0 0.0
          %611 = vmatpush.msra.mxu0 0.0
          %612 = vmatpush.msra.mxu0 0.0
          %613 = vmatpush.msra.mxu0 0.0
          %614 = vmatpush.msra.mxu0 0.0
          %615 = vmatpush.msra.mxu0 %v598
          %616 = vmatmul.f32.gmra.mxu0 %v323
          %v617 = vpop.f32.mrf.mxu0
          %v618 = vadd.f32 %v596, %v617
          %619 = vdwg.mxu0
          %620 = vrot.lane.b32.xlu0 %v572, 126
          %v621 = vpop.permute.xlu0 %620
          %v622 = vsel %vm299, %v621, 0
          %624 = vmatpush.msra.mxu0 0.0
          %625 = vmatpush.msra.mxu0 0.0
          %626 = vmatpush.msra.mxu0 0.0
          %627 = vmatpush.msra.mxu0 0.0
          %628 = vmatpush.msra.mxu0 0.0
          %629 = vmatpush.msra.mxu0 0.0
          %630 = vmatpush.msra.mxu0 0.0
          %631 = vmatpush.msra.mxu0 0.0
          %632 = vmatpush.msra.mxu0 0.0
          %633 = vmatpush.msra.mxu0 0.0
          %634 = vmatpush.msra.mxu0 0.0
          %635 = vmatpush.msra.mxu0 0.0
          %636 = vmatpush.msra.mxu0 0.0
          %637 = vmatpush.msra.mxu0 0.0
          %638 = vmatpush.msra.mxu0 0.0
          %639 = vmatpush.msra.mxu0 %v622
          %640 = vmatmul.f32.gmra.mxu0 %v350
          %v641 = vpop.f32.mrf.mxu0
          %v642 = vadd.f32 0.0, %v641
          %643 = vdwg.mxu0
          %v644 = vadd.f32 %v618, %v642
          %645 = vrot.lane.b32.xlu0 %v572, 125
          %v646 = vpop.permute.xlu0 %645
          %v647 = vsel %vm299, %v646, 0
          %649 = vmatpush.msra.mxu0 0.0
          %650 = vmatpush.msra.mxu0 0.0
          %651 = vmatpush.msra.mxu0 0.0
          %652 = vmatpush.msra.mxu0 0.0
          %653 = vmatpush.msra.mxu0 0.0
          %654 = vmatpush.msra.mxu0 0.0
          %655 = vmatpush.msra.mxu0 0.0
          %656 = vmatpush.msra.mxu0 0.0
          %657 = vmatpush.msra.mxu0 0.0
          %658 = vmatpush.msra.mxu0 0.0
          %659 = vmatpush.msra.mxu0 0.0
          %660 = vmatpush.msra.mxu0 0.0
          %661 = vmatpush.msra.mxu0 0.0
          %662 = vmatpush.msra.mxu0 0.0
          %663 = vmatpush.msra.mxu0 0.0
          %664 = vmatpush.msra.mxu0 %v647
          %665 = vmatmul.f32.gmra.mxu0 %v378
          %v666 = vpop.f32.mrf.mxu0
          %v667 = vadd.f32 0.0, %v666
          %668 = vdwg.mxu0
          %v669 = vadd.f32 %v644, %v667
          %670 = vrot.lane.b32.xlu0 %v572, 124
          %v671 = vpop.permute.xlu0 %670
          %v672 = vsel %vm299, %v671, 0
          %674 = vmatpush.msra.mxu0 0.0
          %675 = vmatpush.msra.mxu0 0.0
          %676 = vmatpush.msra.mxu0 0.0
          %677 = vmatpush.msra.mxu0 0.0
          %678 = vmatpush.msra.mxu0 0.0
          %679 = vmatpush.msra.mxu0 0.0
          %680 = vmatpush.msra.mxu0 0.0
          %681 = vmatpush.msra.mxu0 0.0
          %682 = vmatpush.msra.mxu0 0.0
          %683 = vmatpush.msra.mxu0 0.0
          %684 = vmatpush.msra.mxu0 0.0
          %685 = vmatpush.msra.mxu0 0.0
          %686 = vmatpush.msra.mxu0 0.0
          %687 = vmatpush.msra.mxu0 0.0
          %688 = vmatpush.msra.mxu0 0.0
          %689 = vmatpush.msra.mxu0 %v672
          %690 = vmatmul.f32.gmra.mxu0 %v406
          %v691 = vpop.f32.mrf.mxu0
          %v692 = vadd.f32 0.0, %v691
          %693 = vdwg.mxu0
          %v694 = vadd.f32 %v669, %v692
          %695 = vrot.lane.b32.xlu0 %v572, 123
          %v696 = vpop.permute.xlu0 %695
          %v697 = vsel %vm299, %v696, 0
          %699 = vmatpush.msra.mxu0 0.0
          %700 = vmatpush.msra.mxu0 0.0
          %701 = vmatpush.msra.mxu0 0.0
          %702 = vmatpush.msra.mxu0 0.0
          %703 = vmatpush.msra.mxu0 0.0
          %704 = vmatpush.msra.mxu0 0.0
          %705 = vmatpush.msra.mxu0 0.0
          %706 = vmatpush.msra.mxu0 0.0
          %707 = vmatpush.msra.mxu0 0.0
          %708 = vmatpush.msra.mxu0 0.0
          %709 = vmatpush.msra.mxu0 0.0
          %710 = vmatpush.msra.mxu0 0.0
          %711 = vmatpush.msra.mxu0 0.0
          %712 = vmatpush.msra.mxu0 0.0
          %713 = vmatpush.msra.mxu0 0.0
          %714 = vmatpush.msra.mxu0 %v697
          %715 = vmatmul.f32.gmra.mxu0 %v434
          %v716 = vpop.f32.mrf.mxu0
          %v717 = vadd.f32 0.0, %v716
          %718 = vdwg.mxu0
          %v719 = vadd.f32 %v694, %v717
          %720 = vrot.lane.b32.xlu0 %v572, 122
          %v721 = vpop.permute.xlu0 %720
          %v722 = vsel %vm299, %v721, 0
          %724 = vmatpush.msra.mxu0 0.0
          %725 = vmatpush.msra.mxu0 0.0
          %726 = vmatpush.msra.mxu0 0.0
          %727 = vmatpush.msra.mxu0 0.0
          %728 = vmatpush.msra.mxu0 0.0
          %729 = vmatpush.msra.mxu0 0.0
          %730 = vmatpush.msra.mxu0 0.0
          %731 = vmatpush.msra.mxu0 0.0
          %732 = vmatpush.msra.mxu0 0.0
          %733 = vmatpush.msra.mxu0 0.0
          %734 = vmatpush.msra.mxu0 0.0
          %735 = vmatpush.msra.mxu0 0.0
          %736 = vmatpush.msra.mxu0 0.0
          %737 = vmatpush.msra.mxu0 0.0
          %738 = vmatpush.msra.mxu0 0.0
          %739 = vmatpush.msra.mxu0 %v722
          %740 = vmatmul.f32.gmra.mxu0 %v462
          %v741 = vpop.f32.mrf.mxu0
          %v742 = vadd.f32 0.0, %v741
          %743 = vdwg.mxu0
          %v744 = vadd.f32 %v719, %v742
          %745 = vrot.lane.b32.xlu0 %v572, 121
          %v746 = vpop.permute.xlu0 %745
          %v747 = vsel %vm299, %v746, 0
          %749 = vmatpush.msra.mxu0 0.0
          %750 = vmatpush.msra.mxu0 0.0
          %751 = vmatpush.msra.mxu0 0.0
          %752 = vmatpush.msra.mxu0 0.0
          %753 = vmatpush.msra.mxu0 0.0
          %754 = vmatpush.msra.mxu0 0.0
          %755 = vmatpush.msra.mxu0 0.0
          %756 = vmatpush.msra.mxu0 0.0
          %757 = vmatpush.msra.mxu0 0.0
          %758 = vmatpush.msra.mxu0 0.0
          %759 = vmatpush.msra.mxu0 0.0
          %760 = vmatpush.msra.mxu0 0.0
          %761 = vmatpush.msra.mxu0 0.0
          %762 = vmatpush.msra.mxu0 0.0
          %763 = vmatpush.msra.mxu0 0.0
          %764 = vmatpush.msra.mxu0 %v747
          %765 = vmatmul.f32.gmra.mxu0 %v490
          %v766 = vpop.f32.mrf.mxu0
          %v767 = vadd.f32 0.0, %v766
          %768 = vdwg.mxu0
          %v769 = vadd.f32 %v744, %v767
          %770 = vrot.lane.b32.xlu0 %v572, 120
          %v771 = vpop.permute.xlu0 %770
          %v772 = vsel %vm299, %v771, 0
          %774 = vmatpush.msra.mxu0 0.0
          %775 = vmatpush.msra.mxu0 0.0
          %776 = vmatpush.msra.mxu0 0.0
          %777 = vmatpush.msra.mxu0 0.0
          %778 = vmatpush.msra.mxu0 0.0
          %779 = vmatpush.msra.mxu0 0.0
          %780 = vmatpush.msra.mxu0 0.0
          %781 = vmatpush.msra.mxu0 0.0
          %782 = vmatpush.msra.mxu0 0.0
          %783 = vmatpush.msra.mxu0 0.0
          %784 = vmatpush.msra.mxu0 0.0
          %785 = vmatpush.msra.mxu0 0.0
          %786 = vmatpush.msra.mxu0 0.0
          %787 = vmatpush.msra.mxu0 0.0
          %788 = vmatpush.msra.mxu0 0.0
          %789 = vmatpush.msra.mxu0 %v772
          %790 = vmatmul.f32.gmra.mxu0 %v518
          %v791 = vpop.f32.mrf.mxu0
          %v792 = vadd.f32 0.0, %v791
          %793 = vdwg.mxu0
          %v794 = vadd.f32 %v769, %v792
          %v795 = vadd.f32 %v794, %v546
          %v796 = vmax.f32 %v795, 0.0
          %s797 = sadd.s32 %s550, 1
          %s798 = smul.u32 %s797, 8
          %s799 = scalar_lea.vmem [#allocation2], %s798
          %800 = vst.msk [vmem:[%s799] sm:$0xff] %vm553, %v796
          %v801 = vsel %vm553, %v796, 0.0
          %802 = vadd.xlane.f32.xlu0 %v801
          %v803 = vpop.xlane.xlu0 %802
          %v804 = vadd.f32 %v558, %v803
          %v805 = vld [vmem:[#allocation3] sm:$0xff]
          %v806 = vadd.f32 %v805, %v804
          %vm807 = vcmask 7168
          %808 = vst.msk [vmem:[#allocation3] sm:$0xff] %vm807, %v806
        $region44: #{basic_block_forward.1} parent=39 // pred_fallthru
          _
        %p809 = scmp.eq.s32.totalorder %s23, 1
        // Predicated region
        $region49: #{basic_block_forward.1} parent=39 // pred_check
          %p810 = pneg %p809
        $region50: #{basic_block_forward.1} parent=39 // pred_check_branch
          %812 = sbr.rel (%p810) target = $region52
        $region51: #{basic_block_forward.1} parent=39 // pred_region
          %p813 = scmp.eq.s32.totalorder %s24, 0
          // Predicated region
          $region53: #{basic_block_forward.1} parent=51 // pred_check
            %p814 = pneg %p813
          $region54: #{basic_block_forward.1} parent=51 // pred_check_branch
            %816 = sbr.rel (%p814) target = $region56
          $region55: #{basic_block_forward.1} parent=51 // pred_region
            %v817 = vld [vmem:[#allocation3] sm:$0xff]
            %v818 = vmul.f32 %v817, 0.03125
            %vm819 = vcmask 7168
            %820 = vst.msk [vmem:[#allocation3] sm:$0xff] %vm819, %v818
            %821 = vst.msk [vmem:[#allocation4] sm:$0xff] %vm819, 0.0
          $region56: #{basic_block_forward.1} parent=51 // pred_fallthru
            _
          %v822 = vld [vmem:[#allocation3] sm:$0xff]
          %s823 = smul.u32 %s24, 2
          %s824 = smul.u32 %s823, 8
          %s825 = scalar_lea.vmem [#allocation2], %s824
          %v826 = vld [vmem:[%s825] sm:$0xff]
          %v827 = vld [vmem:[%s825 + $0x8] sm:$0xff]
          %829 = vset.pattern.permute.xlu0 0
          %830 = vperm.xlu0 %829, %v822
          %v831 = vpop.permute.xlu0 %830
          %v833 = vsub.f32 %v826, %v831
          %v834 = vsub.f32 %v827, %v831
          %v835 = vmul.f32 %v833, %v833
          %v836 = vmul.f32 %v834, %v834
          %vm837 = vcmask 130048
          %v838 = vsel %vm837, %v835, 0.0
          %839 = vadd.xlane.f32.xlu0 %v838
          %v840 = vpop.xlane.xlu0 %839
          %v841 = vsel %vm837, %v836, 0.0
          %842 = vadd.xlane.f32.xlu0 %v841
          %v843 = vpop.xlane.xlu0 %842
          %v844 = vld [vmem:[#allocation4] sm:$0xff]
          %v845 = vadd.f32 %v840, %v843
          %v846 = vadd.f32 %v844, %v845
          %vm847 = vcmask 7168
          %848 = vst.msk [vmem:[#allocation4] sm:$0xff] %vm847, %v846
        $region52: #{basic_block_forward.1} parent=39 // pred_fallthru
          _
        %p849 = scmp.eq.s32.totalorder %s23, 2
        // Predicated region
        $region57: #{basic_block_forward.1} parent=39 // pred_check
          %p850 = pneg %p849
        $region58: #{basic_block_forward.1} parent=39 // pred_check_branch
          %852 = sbr.rel (%p850) target = $region60
        $region59: #{basic_block_forward.1} parent=39 // pred_region
          %p853 = scmp.eq.s32.totalorder %s24, 0
          // Predicated region
          $region61: #{basic_block_forward.1} parent=59 // pred_check
            %p854 = pneg %p853
          $region62: #{basic_block_forward.1} parent=59 // pred_check_branch
            %856 = sbr.rel (%p854) target = $region64
          $region63: #{basic_block_forward.1} parent=59 // pred_region
            %v857 = vld [vmem:[#allocation4] sm:$0xff]
            %v858 = vmul.f32 %v857, 0.03125
            %v859 = vadd.f32 %v858, 1e-05
            %v860 = vrsqrt.pop %v859
            %v861 = vmul.f32 %v860, %v859
            %v862 = vmul.f32 %v861, %v860
            %v863 = vmul.f32 0.5, %v862
            %v864 = vsub.f32 1.5, %v863
            %v865 = vmul.f32 %v860, %v864
            %vm866 = vweird.f32 %v859
            %vm867 = vweird.f32 %v860
            %vm868 = vmor %vm866, %vm867
            %v869 = vsel %vm868, %v860, %v865
            %v870 = vld [vmem:[%s3] sm:$0xff]
            %v871 = vmul.f32 %v870, %v869
            %vm872 = vcmask 7168
            %873 = vst.msk [vmem:[#allocation5] sm:$0xff] %vm872, %v871
            %v874 = vld [vmem:[%s4] sm:$0xff]
            %v875 = vld [vmem:[#allocation3] sm:$0xff]
            %v876 = vmul.f32 %v875, %v871
            %v877 = vsub.f32 %v874, %v876
            %878 = vst.msk [vmem:[#allocation6] sm:$0xff] %vm872, %v877
          $region64: #{basic_block_forward.1} parent=59 // pred_fallthru
            _
          %s879 = smul.u32 %s24, 2
          %s880 = smul.u32 %s879, 8
          %s881 = scalar_lea.vmem [#allocation2], %s880
          %v882 = vld [vmem:[%s881] sm:$0xff]
          %v883 = vld [vmem:[%s881 + $0x8] sm:$0xff]
          %v884 = vld [vmem:[#allocation5] sm:$0xff]
          %886 = vset.pattern.permute.xlu0 0
          %887 = vperm.xlu0 %886, %v884
          %v888 = vpop.permute.xlu0 %887
          %v890 = vmul.f32 %v882, %v888
          %v891 = vmul.f32 %v883, %v888
          %v892 = vld [vmem:[#allocation6] sm:$0xff]
          %894 = vset.pattern.permute.xlu0 0
          %895 = vperm.xlu0 %894, %v892
          %v896 = vpop.permute.xlu0 %895
          %v898 = vadd.f32 %v890, %v896
          %v899 = vadd.f32 %v891, %v896
          %vm900 = vcmask 130048
          %901 = vst.msk [vmem:[%s244] sm:$0xff] %vm900, %v898
          %902 = vst.msk [vmem:[%s244 + $0x8] sm:$0xff] %vm900, %v899
        $region60: #{basic_block_forward.1} parent=39 // pred_fallthru
          _
        %s903 = sand.u32 %s157, 1
        %s904 = scalar_lea.sflag [#allocation8], %s903
        %s905 = sand.u32 %s157, 1
        %s906 = smul.addr %s905, 16
        %s907 = scalar_lea.vmem [#allocation7], %s906
        // Predicated region
        $region65: #{basic_block_forward.1} parent=39 // pred_check
          %p908 = pneg %p167
        $region66: #{basic_block_forward.1} parent=39 // pred_check_branch
          %910 = sbr.rel (%p908) target = $region68
        $region67: #{basic_block_forward.1} parent=39 // pred_region
          %p911 = scmp.eq.s32.totalorder %s23, 2
          %s912 = scalar_select %p911, %s24, 0
          %s913 = smul.u32 2, %s912
          %915 = vsyncadd %s904, 0
          %s916 = smul.addr %s913, 8
          %s917 = scalar_lea.hbm %s5, %s916
          %s918 = sshll.u32 %s907, 4
          %s919 = int_to_ptr.vmem [resolvable:$true] %s918
          %s920 = sshll.u32 %s917, 4
          %s921 = int_to_ptr.hbm [resolvable:$true] %s920
          %926 = dma.vmem_to_hbm [thread:$0]  %s919, 256, %s921, %s904, 128, 128, 8
        $region68: #{basic_block_forward.1} parent=39 // pred_fallthru
          _
      $region40: #{basic_block_forward.1} parent=5 // pred_fallthru
        _
      %p927 = scmp.le.s32.totalorder 2, %s14
      // Predicated region
      $region69: #{basic_block_forward.1} parent=5 // pred_check
        %p928 = pneg %p927
      $region70: #{basic_block_forward.1} parent=5 // pred_check_branch
        %930 = sbr.rel (%p928) target = $region72
      $region71: #{basic_block_forward.1} parent=5 // pred_region
        %s931 = ssub.s32 %s14, 2
        // Predicated region
        $region73: #{basic_block_forward.1} parent=71 // pred_check
          %p932 = pneg %p173
        $region74: #{basic_block_forward.1} parent=71 // pred_check_branch
          %934 = sbr.rel (%p932) target = $region76
        $region75: #{basic_block_forward.1} parent=71 // pred_region
          %s935 = sand.u32 %s158, 1
          %s936 = scalar_lea.sflag [#allocation8], %s935
          %s937 = sand.u32 %s158, 1
          %s938 = smul.addr %s937, 16
          %s939 = scalar_lea.vmem [#allocation7], %s938
          %941 = dma.done %s936, 256
        $region76: #{basic_block_forward.1} parent=71 // pred_fallthru
          _
      $region72: #{basic_block_forward.1} parent=5 // pred_fallthru
        _
    $region6: #{basic_block_forward.1} parent=1 // loop_footer
      %s18 = sadd.s32 1, %s14
    $region7: #{basic_block_forward.1} parent=1 // loop_footer_branch
      %13 = sbr.rel target = $region3
    $region8: #{basic_block_forward.1} parent=1 // loop_exit
      _
    %942 = vsyncpa [#allocation8], 1
    %s943 = scalar_lea.sflag [#allocation8], 1
    %944 = vsyncpa %s943, 1

</llo_original>
